<compile_context>
chip_gen: v7x
topology: tpu7x:2x2x1
jax: 0.10.0
libtpu: 0.0.40
codegen_flags: <defaults>
</compile_context>

<pallas_src>
import functools

import numpy as np
import jax
import jax.numpy as jnp
from jax import lax
from jax.experimental import pallas as pl
from jax.experimental.pallas import tpu as pltpu

_LANE = 128
_CIN0 = 8                         # RGB input padded 3 -> 8 channels


# ----------------------------------------------------------------------------
# static helpers
# ----------------------------------------------------------------------------
def _round_up(x, m):
    return (x + m - 1) // m * m


def _query_vmem_bytes():
    try:
        info = pltpu.get_tpu_info()
        v = int(getattr(info, "vmem_capacity_bytes", 0))
        if v >= 32 * 1024 * 1024:
            return v
    except Exception:
        pass
    return 64 * 1024 * 1024       # conservative fallback (v7x per-TC VMEM)


_VMEM_PHYS = _query_vmem_bytes()
# Scoped-VMEM limit handed to Mosaic: headroom below physical, capped at 96 MiB
# (review: ~96 MiB is worthwhile on v6e/v5e; v7x stays at ~48 MiB).
_VMEM_LIMIT = max(32 * 1024 * 1024,
                  min(_VMEM_PHYS - 16 * 1024 * 1024,
                      (_VMEM_PHYS * 3) // 4,
                      96 * 1024 * 1024))
# Working-set budget used by the tile pickers.
_CONV_BUDGET = int(_VMEM_LIMIT * 0.75)


def _divisors_desc(n_, step):
    return [d for d in range(n_, step - 1, -step) if n_ % d == 0]


def _channel_tile(c, cap):
    if c <= cap:
        return c
    for d in _divisors_desc(c, _LANE):
        if d <= cap:
            return d
    return c


def _pick_tn(cin_p, cout_p, w_budget):
    """Largest mult-of-128 divisor of cout_p whose double-buffered
    (9, cin_p, tn) bf16 weight slab fits in w_budget."""
    for d in _divisors_desc(cout_p, _LANE):
        if 2 * 9 * cin_p * d * 2 <= w_budget:
            return d
    return _LANE


def _pick_th(h, wpd, cin_p, tn, budget):
    """Largest divisor of h whose per-block working set fits in budget."""
    for th in _divisors_desc(h, 1):
        rows = (th + 2) * wpd
        p_rows = _round_up(rows + 2, 8)
        m2 = th * wpd
        need = (2 * p_rows * cin_p * 2      # input block, double buffered
                + m2 * tn * 4               # f32 accumulator scratch
                + 2 * m2 * tn * 2)          # output block, double buffered
        if need <= budget:
            return th
    return 1


def _reflect_indices(n_, upsample):
    """Source indices for (optional 2x nearest upsample) + reflect pad by 1."""
    base = np.repeat(np.arange(n_), 2) if upsample else np.arange(n_)
    return np.concatenate([base[1:2], base, base[-2:-1]])


# ----------------------------------------------------------------------------
# Direct 3x3 reflect-pad conv kernel (full-K resident, 9 taps in-kernel)
# ----------------------------------------------------------------------------
def _conv3x3_kernel(a_ref, w_ref, b_ref, o_ref, acc_ref, *, wpd, m2, act):
    """a_ref is a row-flattened, reflect-padded activation slab (1,p_rows,cin);
    tap (kh, kw) is the contiguous window starting at flat row kh*wpd + kw.
    Per-tap `+=` keeps the f32 accumulator's live range to one tile (it
    round-trips VMEM, not the vreg file)."""
    acc_ref[...] = jnp.dot(a_ref[0, pl.ds(0, m2), :], w_ref[0],
                           preferred_element_type=jnp.float32)
    for t in range(1, 9):
        s = (t // 3) * wpd + (t % 3)
        acc_ref[...] += jnp.dot(a_ref[0, pl.ds(s, m2), :], w_ref[t],
                                preferred_element_type=jnp.float32)
    r = acc_ref[...] + b_ref[...]
    if act == "relu":
        r = jnp.maximum(r, 0.0)
    elif act == "tanh":
        r = jnp.tanh(r)
    o_ref[0] = r.astype(o_ref.dtype)


def conv3x3_reflect(x, in_w, layer, act=None, upsample=False,
                    th_override=None, tn_override=None):
    """3x3 stride-1 reflect-pad conv (optionally with a fused 2x nearest
    upsample of the input), NHWC, channel dims padded to multiples of 128.

    x      : (n, h_in, w_store, cin_p) bf16; only columns [0, in_w) are valid
             (columns >= in_w are the previous layer's padded-width garbage and
             are never read here).
    returns: (out, wd) with out (n, h, wd + 2, cout_p) bf16; only columns
             [0, wd) are valid -- layout carried into the next layer (no trim
             copy)."""
    wgt, bias = layer["w"], layer["b"]     # (9,cin_p,cout_p) bf16, (1,cout_p) f32
    n, h_in, w_store, cin_p = x.shape
    assert wgt.shape[1] == cin_p and in_w <= w_store
    cout_p = wgt.shape[2]
    h = 2 * h_in if upsample else h_in
    wd = 2 * in_w if upsample else in_w
    wpd = wd + 2

    # VMEM-budget-adaptive tiles
    tn = tn_override or _pick_tn(cin_p, cout_p, _CONV_BUDGET // 2)
    th = th_override or _pick_th(h, wpd, cin_p, tn,
                                 _CONV_BUDGET - 2 * 9 * cin_p * tn * 2)
    assert cout_p % tn == 0 and h % th == 0
    hb = h // th
    nhb = n * hb
    rows = (th + 2) * wpd
    p_rows = _round_up(rows + 2, 8)        # +2: tap (2,2) over-reads 2 rows
    m2 = th * wpd

    # ONE gather: (upsample +) reflect pad + row-block halos + tail pad rows
    idx_h = _reflect_indices(h_in, upsample)                       # (h+2,)
    idx_w = _reflect_indices(in_w, upsample)                       # (wpd,)
    p = np.arange(p_rows)
    r_loc = np.minimum(p // wpd, th + 1)                           # clamp tail
    w_loc = p % wpd
    rsrc = idx_h[np.arange(hb)[:, None] * th + r_loc[None, :]]     # (hb,p_rows)
    csrc = idx_w[w_loc][None, :]                                   # (1, p_rows)
    xf = x[:, rsrc, csrc, :].astype(jnp.bfloat16).reshape(nhb, p_rows, cin_p)

    # Grid: cout tiles OUTER, batch/row blocks INNER -> each weight block's
    # index only changes with j, so every weight byte crosses HBM exactly once.
    out = pl.pallas_call(
        functools.partial(_conv3x3_kernel, wpd=wpd, m2=m2, act=act),
        out_shape=jax.ShapeDtypeStruct((nhb, m2, cout_p), jnp.bfloat16),
        grid=(cout_p // tn, nhb),
        in_specs=[
            pl.BlockSpec((1, p_rows, cin_p), lambda j, m: (m, 0, 0)),
            pl.BlockSpec((9, cin_p, tn), lambda j, m: (0, 0, j)),
            pl.BlockSpec((1, tn), lambda j, m: (0, j)),
        ],
        out_specs=pl.BlockSpec((1, m2, tn), lambda j, m: (m, 0, j)),
        scratch_shapes=[pltpu.VMEM((m2, tn), jnp.float32)],
        compiler_params=pltpu.CompilerParams(
            dimension_semantics=("parallel", "parallel"),
            vmem_limit_bytes=_VMEM_LIMIT),
    )(xf, wgt, bias)

    # (n*hb, th*wpd, c) -> (n, h, wpd, c): pure metadata reshape, no copy.
    return out.reshape(n, h, wpd, cout_p), wd


def maxpool2x2(x, in_w):
    # TODO(synk): could be fused into the preceding conv's epilogue to save one
    # activation HBM round trip per pool stage.
    xh = jnp.maximum(x[:, 0::2], x[:, 1::2])
    out = jnp.maximum(xh[:, :, 0:in_w:2], xh[:, :, 1:in_w:2])
    return out, in_w // 2


# ----------------------------------------------------------------------------
# AdaIN (+ alpha blend) kernel, one-pass stats, tiled over (batch, channels)
# ----------------------------------------------------------------------------
def _adain_kernel(x_ref, y_ref, o_ref, *, alpha, hwx, hwy):
    # torch.std default: unbiased (divide by HW-1); eps added OUTSIDE the sqrt.
    # pl.reciprocal(approx=True) deviates ~1e-3 rel from exact division (EUP
    # slot -> effectively free); acceptable for style transfer.
    eps = 1e-5
    x = x_ref[0].astype(jnp.float32)              # (hwx, tc)
    y = y_ref[0].astype(jnp.float32)              # (hwy, tc)
    sx = jnp.sum(x, axis=0, keepdims=True)
    sxx = jnp.sum(x * x, axis=0, keepdims=True)
    sy = jnp.sum(y, axis=0, keepdims=True)
    syy = jnp.sum(y * y, axis=0, keepdims=True)
    mean_x = sx * (1.0 / hwx)
    mean_y = sy * (1.0 / hwy)
    var_x = jnp.maximum(sxx - sx * mean_x, 0.0) * (1.0 / max(hwx - 1.0, 1.0))
    var_y = jnp.maximum(syy - sy * mean_y, 0.0) * (1.0 / max(hwy - 1.0, 1.0))
    inv_std_x = pl.reciprocal(jnp.sqrt(var_x) + eps, approx=True)
    std_y = jnp.sqrt(var_y) + eps
    out = (x - mean_x) * (inv_std_x * std_y) + mean_y
    o_ref[0] = (alpha * out + (1.0 - alpha) * x).astype(o_ref.dtype)


def adain_blend(x, y, alpha):
    """out = alpha * AdaIN(x, y) + (1 - alpha) * x, stats per (batch, channel)."""
    n, hx, wx, c = x.shape
    ny, hy, wy, cy = y.shape
    assert n == ny and c == cy
    hwx, hwy = hx * wx, hy * wy
    tc = _channel_tile(c, 512)
    x3 = x.reshape(n, hwx, c)
    y3 = y.reshape(n, hwy, c)
    out = pl.pallas_call(
        functools.partial(_adain_kernel, alpha=float(alpha),
                          hwx=float(hwx), hwy=float(hwy)),
        out_shape=jax.ShapeDtypeStruct((n, hwx, c), x.dtype),
        grid=(n, c // tc),
        in_specs=[pl.BlockSpec((1, hwx, tc), lambda i, j: (i, 0, j)),
                  pl.BlockSpec((1, hwy, tc), lambda i, j: (i, 0, j))],
        out_specs=pl.BlockSpec((1, hwx, tc), lambda i, j: (i, 0, j)),
        compiler_params=pltpu.CompilerParams(
            dimension_semantics=("parallel", "parallel"),
            vmem_limit_bytes=_VMEM_LIMIT),
    )(x3, y3)
    return out.reshape(n, hx, wx, c)


# ----------------------------------------------------------------------------
# Parameters (deterministic Kaiming-like init, packed bf16, lane-padded)
# ----------------------------------------------------------------------------
def _kaiming(key, ks, cin, cout):
    fan_in = ks * ks * cin
    return jax.random.normal(key, (ks, ks, cin, cout), jnp.float32) * \
        jnp.sqrt(2.0 / fan_in)


def _pack3x3(w, b, cin_p):
    """(3,3,cin,cout) f32 + (cout,) f32 -> weight (9,cin_p,cout_p) bf16,
    bias (1,cout_p) f32, channels zero-padded to multiples of 128."""
    cin, cout = w.shape[2], w.shape[3]
    cout_p = _round_up(cout, _LANE)
    wp = jnp.zeros((9, cin_p, cout_p), jnp.bfloat16)
    wp = wp.at[:, :cin, :cout].set(w.reshape(9, cin, cout).astype(jnp.bfloat16))
    bp = jnp.zeros((1, cout_p), jnp.float32).at[0, :cout].set(b)
    return {"w": wp, "b": bp}


_ENCODER_CONVS = [(3, 64), (64, 64), (64, 128), (128, 128),
                  (128, 256), (256, 256), (256, 256), (256, 256)]
_DECODER_CONVS = [(1024, 2048), (2048, 1024), (1024, 512), (512, 256),
                  (256, 128), (128, 128), (128, 64), (64, 64), (64, 3)]


def _init_stack(key, convspec, first_cin_p, fuse_1x1):
    nl = len(convspec)
    keys = jax.random.split(key, 2 * nl + 2)
    layers = []
    if fuse_1x1:
        # The encoders begin with Conv2d(3,3,1x1) with NO activation before the
        # first 3x3 conv, so it folds exactly into that conv:
        #   W'[t] = W1 @ W3[t]     b' = b1 @ sum_t W3[t] + b3
        w1 = _kaiming(keys[-2], 1, 3, 3)[0, 0]                        # (3, 3)
        b1 = 0.05 * jax.random.normal(keys[-1], (3,), jnp.float32)
    cin_p = first_cin_p
    for li, (cin, cout) in enumerate(convspec):
        w = _kaiming(keys[2 * li], 3, cin, cout)
        b = 0.05 * jax.random.normal(keys[2 * li + 1], (cout,), jnp.float32)
        if li == 0 and fuse_1x1:
            b = b1 @ w.sum(axis=(0, 1)) + b
            w = jnp.einsum("im,hwmo->hwio", w1, w)
        layers.append(_pack3x3(w, b, cin_p))
        cin_p = _round_up(cout, _LANE)
    return layers


def init_g_params(key):
    ka, kb, k2, kd = jax.random.split(key, 4)
    return {
        "encodera": _init_stack(ka, _ENCODER_CONVS + [(256, 512)], _CIN0, True),
        "encoderb": _init_stack(kb, _ENCODER_CONVS + [(256, 512)], _CIN0, True),
        "encoder2": _init_stack(k2, _ENCODER_CONVS + [(256, 1024)], _CIN0, True),
        "decoder": _init_stack(kd, _DECODER_CONVS, 1024, False),
    }


# ----------------------------------------------------------------------------
# Network forward (mirrors the nn.Sequential structures)
# ----------------------------------------------------------------------------
def encoder_forward(params, x, in_w):
    x, in_w = conv3x3_reflect(x, in_w, params[0], act="relu")  # fused 1x1 + 3x3
    x, in_w = conv3x3_reflect(x, in_w, params[1], act="relu")
    x, in_w = maxpool2x2(x, in_w)
    x, in_w = conv3x3_reflect(x, in_w, params[2], act="relu")
    x, in_w = conv3x3_reflect(x, in_w, params[3], act="relu")
    x, in_w = maxpool2x2(x, in_w)
    x, in_w = conv3x3_reflect(x, in_w, params[4], act="relu")
    x, in_w = conv3x3_reflect(x, in_w, params[5], act="relu")
    x, in_w = conv3x3_reflect(x, in_w, params[6], act="relu")
    x, in_w = conv3x3_reflect(x, in_w, params[7], act="relu")
    x, in_w = maxpool2x2(x, in_w)
    x, in_w = conv3x3_reflect(x, in_w, params[8], act="relu")
    return x, in_w


def decoder_forward(params, x, in_w):
    x, in_w = conv3x3_reflect(x, in_w, params[0], act="relu")
    x, in_w = conv3x3_reflect(x, in_w, params[1], act="relu", upsample=True)
    x, in_w = conv3x3_reflect(x, in_w, params[2], act="relu")
    x, in_w = conv3x3_reflect(x, in_w, params[3], act="relu")
    x, in_w = conv3x3_reflect(x, in_w, params[4], act="relu")
    x, in_w = conv3x3_reflect(x, in_w, params[5], act="relu", upsample=True)
    x, in_w = conv3x3_reflect(x, in_w, params[6], act="relu")
    x, in_w = conv3x3_reflect(x, in_w, params[7], act="relu", upsample=True)
    x, in_w = conv3x3_reflect(x, in_w, params[8], act="tanh")
    return x, in_w


def g_forward(params, x_nchw, y_nchw_pair, alpha=1.0):
    """Forward pass of G.  Inputs/outputs are NCHW like the PyTorch module."""
    def prep(t):
        t = jnp.transpose(t, (0, 2, 3, 1)).astype(jnp.bfloat16)   # NCHW -> NHWC
        n, h, w, c = t.shape
        return jnp.pad(t, ((0, 0), (0, 0), (0, 0), (0, _CIN0 - c))), w

    x, wx = prep(x_nchw)
    y0, wy0 = prep(y_nchw_pair[0])
    y1, wy1 = prep(y_nchw_pair[1])

    sa, wa = encoder_forward(params["encodera"], y0, wy0)
    sb, wb = encoder_forward(params["encoderb"], y1, wy1)
    sc, wc = encoder_forward(params["encoder2"], x, wx)

    # trim the (tiny) bottleneck maps to their valid width, concat styles on C
    style = jnp.concatenate([sa[:, :, :wa, :], sb[:, :, :wb, :]], axis=-1)
    content = sc[:, :, :wc, :]

    mixed = adain_blend(content, style, alpha)

    gen, wg = decoder_forward(params["decoder"], mixed, wc)
    gen = gen[:, :, :wg, :3].astype(jnp.float32)   # drop width/channel padding
    return jnp.transpose(gen, (0, 3, 1, 2))        # back to NCHW


# ----------------------------------------------------------------------------
# lightweight self-checks against pure-JAX references
# ----------------------------------------------------------------------------
def _conv3x3_reference(x, layer, act, upsample):
    cin_p = layer["w"].shape[1]
    w = layer["w"].astype(jnp.float32).reshape(3, 3, cin_p, -1)
    b = layer["b"].astype(jnp.float32)[0]
    xf = x.astype(jnp.bfloat16).astype(jnp.float32)
    if upsample:
        xf = jnp.repeat(jnp.repeat(xf, 2, axis=1), 2, axis=2)
    xp = jnp.pad(xf, ((0, 0), (1, 1), (1, 1), (0, 0)), mode="reflect")
    out = lax.conv_general_dilated(
        xp, w, window_strides=(1, 1), padding="VALID",
        dimension_numbers=("NHWC", "HWIO", "NHWC")) + b
    if act == "relu":
        out = jnp.maximum(out, 0.0)
    elif act == "tanh":
        out = jnp.tanh(out)
    return out


def _adain_reference(x, y, alpha):
    xf = x.astype(jnp.float32)
    yf = y.astype(jnp.float32)
    hwx = x.shape[1] * x.shape[2]
    hwy = y.shape[1] * y.shape[2]
    mean_x = xf.mean(axis=(1, 2), keepdims=True)
    mean_y = yf.mean(axis=(1, 2), keepdims=True)
    std_x = jnp.sqrt(((xf - mean_x) ** 2).sum(axis=(1, 2), keepdims=True)
                     / (hwx - 1)) + 1e-5
    std_y = jnp.sqrt(((yf - mean_y) ** 2).sum(axis=(1, 2), keepdims=True)
                     / (hwy - 1)) + 1e-5
    out = (xf - mean_x) / std_x * std_y + mean_y
    return alpha * out + (1.0 - alpha) * xf


def _self_test(key):
    ks = jax.random.split(key, 8)

    def check_conv(kw, kx, cin, cin_p, cout, h, w, act, ups, th_ov, tn_ov):
        wgt = _kaiming(kw, 3, cin, cout)
        bia = 0.05 * jax.random.normal(kw, (cout,), jnp.float32)
        layer = _pack3x3(wgt, bia, cin_p)
        x = jax.random.normal(kx, (1, h, w, cin_p), jnp.float32)
        got, wd = conv3x3_reflect(x.astype(jnp.bfloat16), w, layer, act=act,
                                  upsample=ups, th_override=th_ov,
                                  tn_override=tn_ov)
        ref = _conv3x3_reference(x, layer, act, ups)
        assert bool(jnp.allclose(got[:, :, :wd, :].astype(jnp.float32), ref,
                                 rtol=5e-2, atol=5e-2)), "conv mismatch"

    # multi-row-block path (hb = 2)
    check_conv(ks[0], ks[1], 128, 128, 128, 8, 8, "relu", False, 4, None)
    # fused-upsample path with multiple cout tiles (J = 2)
    check_conv(ks[2], ks[3], 128, 128, 256, 8, 8, "relu", True, None, 128)
    # first-layer path: tiny (padded-to-8) input channel count
    check_conv(ks[4], ks[5], 3, _CIN0, 64, 16, 16, "relu", False, None, None)

    a = jax.random.normal(ks[6], (2, 4, 4, 256), jnp.float32).astype(jnp.bfloat16)
    b = jax.random.normal(ks[7], (2, 4, 4, 256), jnp.float32).astype(jnp.bfloat16)
    got = adain_blend(a, b, 0.7)
    ref = _adain_reference(a, b, 0.7)
    assert bool(jnp.allclose(got.astype(jnp.float32), ref,
                             rtol=5e-2, atol=5e-2)), "adain mismatch"


# ----------------------------------------------------------------------------
if __name__ == "__main__":
    key = jax.random.PRNGKey(0)
    kp, kx, ky0, ky1, kt = jax.random.split(key, 5)

    _self_test(kt)

    params = init_g_params(kp)

    # small shapes consistent with the module: 3-channel 16x16 images, batch 2
    x = jax.random.normal(kx, (2, 3, 16, 16), jnp.float32)
    y0 = jax.random.normal(ky0, (2, 3, 16, 16), jnp.float32)
    y1 = jax.random.normal(ky1, (2, 3, 16, 16), jnp.float32)

    fwd = jax.jit(lambda p, a, b, c: g_forward(p, a, (b, c), alpha=1.0))
    out = jax.block_until_ready(fwd(params, x, y0, y1))

    assert out.shape == (2, 3, 16, 16), out.shape
    assert bool(jnp.all(jnp.isfinite(out)))
    # decoder ends in tanh -> bounded output
    assert bool(jnp.all(jnp.abs(out) <= 1.0 + 1e-6))
    print("KERNEL_OK")
</pallas_src>

<mosaic_0001>
module attributes {stable_mosaic.version = 11 : i64} {
  func.func @_conv3x3_kernel(%arg0: i32, %arg1: i32, %arg2: memref<1x64x128xbf16, #tpu.memory_space<vmem>>, %arg3: memref<9x128x128xbf16, #tpu.memory_space<vmem>>, %arg4: memref<1x128xf32, #tpu.memory_space<vmem>>, %arg5: memref<1x40x128xbf16, #tpu.memory_space<vmem>>, %arg6: memref<40x128xf32, #tpu.memory_space<vmem>>) attributes {dimension_semantics = [#tpu.dimension_semantics<parallel>, #tpu.dimension_semantics<parallel>], iteration_bounds = array<i64: 1, 2>, scalar_prefetch = 0 : i64, scratch_operands = 1 : i64, tpu.core_type = #tpu.core_type<tc>, window_params = [{transform_indices = @transform_0, window_bounds = array<i64: 1, 64, 128>}, {transform_indices = @transform_1, window_bounds = array<i64: 9, 128, 128>}, {transform_indices = @transform_2, window_bounds = array<i64: 1, 128>}, {transform_indices = @transform_3, window_bounds = array<i64: 1, 40, 128>}]} {
    %c0 = arith.constant 0 : index
    %c0_0 = arith.constant 0 : index
    %c0_1 = arith.constant 0 : index
    %0 = vector.load %arg2[%c0, %c0_0, %c0_1] : memref<1x64x128xbf16, #tpu.memory_space<vmem>>, vector<1x40x128xbf16>
    %1 = vector.shape_cast %0 : vector<1x40x128xbf16> to vector<40x128xbf16>
    %c0_2 = arith.constant 0 : index
    %c0_3 = arith.constant 0 : index
    %c0_4 = arith.constant 0 : index
    %2 = vector.load %arg3[%c0_2, %c0_3, %c0_4] : memref<9x128x128xbf16, #tpu.memory_space<vmem>>, vector<1x128x128xbf16>
    %3 = vector.shape_cast %2 : vector<1x128x128xbf16> to vector<128x128xbf16>
    %cst = arith.constant dense<0.000000e+00> : vector<40x128xf32>
    %4 = tpu.matmul %1, %3, %cst {dimension_numbers = #tpu.dot_dimension_numbers<[1], [0], [0], [1], [0, 0, 1, 1], [], []>} : vector<40x128xbf16>, vector<128x128xbf16>, vector<40x128xf32> -> vector<40x128xf32>
    %c0_5 = arith.constant 0 : index
    %c0_6 = arith.constant 0 : index
    %5 = vector.load %arg6[%c0_5, %c0_6] : memref<40x128xf32, #tpu.memory_space<vmem>>, vector<40x128xf32>
    tpu.vector_store %arg6[%c0_5, %c0_6], %4 {strides = array<i32>} : memref<40x128xf32, #tpu.memory_space<vmem>>, vector<40x128xf32>,
    %c0_7 = arith.constant 0 : index
    %c0_8 = arith.constant 0 : index
    %6 = vector.load %arg6[%c0_7, %c0_8] : memref<40x128xf32, #tpu.memory_space<vmem>>, vector<40x128xf32>
    %c0_9 = arith.constant 0 : index
    %c1 = arith.constant 1 : index
    %c0_10 = arith.constant 0 : index
    %7 = vector.load %arg2[%c0_9, %c1, %c0_10] : memref<1x64x128xbf16, #tpu.memory_space<vmem>>, vector<1x40x128xbf16>
    %8 = vector.shape_cast %7 : vector<1x40x128xbf16> to vector<40x128xbf16>
    %c1_11 = arith.constant 1 : index
    %c0_12 = arith.constant 0 : index
    %c0_13 = arith.constant 0 : index
    %9 = vector.load %arg3[%c1_11, %c0_12, %c0_13] : memref<9x128x128xbf16, #tpu.memory_space<vmem>>, vector<1x128x128xbf16>
    %10 = vector.shape_cast %9 : vector<1x128x128xbf16> to vector<128x128xbf16>
    %cst_14 = arith.constant dense<0.000000e+00> : vector<40x128xf32>
    %11 = tpu.matmul %8, %10, %cst_14 {dimension_numbers = #tpu.dot_dimension_numbers<[1], [0], [0], [1], [0, 0, 1, 1], [], []>} : vector<40x128xbf16>, vector<128x128xbf16>, vector<40x128xf32> -> vector<40x128xf32>
    %12 = arith.addf %6, %11 : vector<40x128xf32>
    %c0_15 = arith.constant 0 : index
    %c0_16 = arith.constant 0 : index
    %13 = vector.load %arg6[%c0_15, %c0_16] : memref<40x128xf32, #tpu.memory_space<vmem>>, vector<40x128xf32>
    tpu.vector_store %arg6[%c0_15, %c0_16], %12 {strides = array<i32>} : memref<40x128xf32, #tpu.memory_space<vmem>>, vector<40x128xf32>,
    %c0_17 = arith.constant 0 : index
    %c0_18 = arith.constant 0 : index
    %14 = vector.load %arg6[%c0_17, %c0_18] : memref<40x128xf32, #tpu.memory_space<vmem>>, vector<40x128xf32>
    %c0_19 = arith.constant 0 : index
    %c2 = arith.constant 2 : index
    %c0_20 = arith.constant 0 : index
    %15 = vector.load %arg2[%c0_19, %c2, %c0_20] : memref<1x64x128xbf16, #tpu.memory_space<vmem>>, vector<1x40x128xbf16>
    %16 = vector.shape_cast %15 : vector<1x40x128xbf16> to vector<40x128xbf16>
    %c2_21 = arith.constant 2 : index
    %c0_22 = arith.constant 0 : index
    %c0_23 = arith.constant 0 : index
    %17 = vector.load %arg3[%c2_21, %c0_22, %c0_23] : memref<9x128x128xbf16, #tpu.memory_space<vmem>>, vector<1x128x128xbf16>
    %18 = vector.shape_cast %17 : vector<1x128x128xbf16> to vector<128x128xbf16>
    %cst_24 = arith.constant dense<0.000000e+00> : vector<40x128xf32>
    %19 = tpu.matmul %16, %18, %cst_24 {dimension_numbers = #tpu.dot_dimension_numbers<[1], [0], [0], [1], [0, 0, 1, 1], [], []>} : vector<40x128xbf16>, vector<128x128xbf16>, vector<40x128xf32> -> vector<40x128xf32>
    %20 = arith.addf %14, %19 : vector<40x128xf32>
    %c0_25 = arith.constant 0 : index
    %c0_26 = arith.constant 0 : index
    %21 = vector.load %arg6[%c0_25, %c0_26] : memref<40x128xf32, #tpu.memory_space<vmem>>, vector<40x128xf32>
    tpu.vector_store %arg6[%c0_25, %c0_26], %20 {strides = array<i32>} : memref<40x128xf32, #tpu.memory_space<vmem>>, vector<40x128xf32>,
    %c0_27 = arith.constant 0 : index
    %c0_28 = arith.constant 0 : index
    %22 = vector.load %arg6[%c0_27, %c0_28] : memref<40x128xf32, #tpu.memory_space<vmem>>, vector<40x128xf32>
    %c0_29 = arith.constant 0 : index
    %c10 = arith.constant 10 : index
    %c0_30 = arith.constant 0 : index
    %23 = vector.load %arg2[%c0_29, %c10, %c0_30] : memref<1x64x128xbf16, #tpu.memory_space<vmem>>, vector<1x40x128xbf16>
    %24 = vector.shape_cast %23 : vector<1x40x128xbf16> to vector<40x128xbf16>
    %c3 = arith.constant 3 : index
    %c0_31 = arith.constant 0 : index
    %c0_32 = arith.constant 0 : index
    %25 = vector.load %arg3[%c3, %c0_31, %c0_32] : memref<9x128x128xbf16, #tpu.memory_space<vmem>>, vector<1x128x128xbf16>
    %26 = vector.shape_cast %25 : vector<1x128x128xbf16> to vector<128x128xbf16>
    %cst_33 = arith.constant dense<0.000000e+00> : vector<40x128xf32>
    %27 = tpu.matmul %24, %26, %cst_33 {dimension_numbers = #tpu.dot_dimension_numbers<[1], [0], [0], [1], [0, 0, 1, 1], [], []>} : vector<40x128xbf16>, vector<128x128xbf16>, vector<40x128xf32> -> vector<40x128xf32>
    %28 = arith.addf %22, %27 : vector<40x128xf32>
    %c0_34 = arith.constant 0 : index
    %c0_35 = arith.constant 0 : index
    %29 = vector.load %arg6[%c0_34, %c0_35] : memref<40x128xf32, #tpu.memory_space<vmem>>, vector<40x128xf32>
    tpu.vector_store %arg6[%c0_34, %c0_35], %28 {strides = array<i32>} : memref<40x128xf32, #tpu.memory_space<vmem>>, vector<40x128xf32>,
    %c0_36 = arith.constant 0 : index
    %c0_37 = arith.constant 0 : index
    %30 = vector.load %arg6[%c0_36, %c0_37] : memref<40x128xf32, #tpu.memory_space<vmem>>, vector<40x128xf32>
    %c0_38 = arith.constant 0 : index
    %c11 = arith.constant 11 : index
    %c0_39 = arith.constant 0 : index
    %31 = vector.load %arg2[%c0_38, %c11, %c0_39] : memref<1x64x128xbf16, #tpu.memory_space<vmem>>, vector<1x40x128xbf16>
    %32 = vector.shape_cast %31 : vector<1x40x128xbf16> to vector<40x128xbf16>
    %c4 = arith.constant 4 : index
    %c0_40 = arith.constant 0 : index
    %c0_41 = arith.constant 0 : index
    %33 = vector.load %arg3[%c4, %c0_40, %c0_41] : memref<9x128x128xbf16, #tpu.memory_space<vmem>>, vector<1x128x128xbf16>
    %34 = vector.shape_cast %33 : vector<1x128x128xbf16> to vector<128x128xbf16>
    %cst_42 = arith.constant dense<0.000000e+00> : vector<40x128xf32>
    %35 = tpu.matmul %32, %34, %cst_42 {dimension_numbers = #tpu.dot_dimension_numbers<[1], [0], [0], [1], [0, 0, 1, 1], [], []>} : vector<40x128xbf16>, vector<128x128xbf16>, vector<40x128xf32> -> vector<40x128xf32>
    %36 = arith.addf %30, %35 : vector<40x128xf32>
    %c0_43 = arith.constant 0 : index
    %c0_44 = arith.constant 0 : index
    %37 = vector.load %arg6[%c0_43, %c0_44] : memref<40x128xf32, #tpu.memory_space<vmem>>, vector<40x128xf32>
    tpu.vector_store %arg6[%c0_43, %c0_44], %36 {strides = array<i32>} : memref<40x128xf32, #tpu.memory_space<vmem>>, vector<40x128xf32>,
    %c0_45 = arith.constant 0 : index
    %c0_46 = arith.constant 0 : index
    %38 = vector.load %arg6[%c0_45, %c0_46] : memref<40x128xf32, #tpu.memory_space<vmem>>, vector<40x128xf32>
    %c0_47 = arith.constant 0 : index
    %c12 = arith.constant 12 : index
    %c0_48 = arith.constant 0 : index
    %39 = vector.load %arg2[%c0_47, %c12, %c0_48] : memref<1x64x128xbf16, #tpu.memory_space<vmem>>, vector<1x40x128xbf16>
    %40 = vector.shape_cast %39 : vector<1x40x128xbf16> to vector<40x128xbf16>
    %c5 = arith.constant 5 : index
    %c0_49 = arith.constant 0 : index
    %c0_50 = arith.constant 0 : index
    %41 = vector.load %arg3[%c5, %c0_49, %c0_50] : memref<9x128x128xbf16, #tpu.memory_space<vmem>>, vector<1x128x128xbf16>
    %42 = vector.shape_cast %41 : vector<1x128x128xbf16> to vector<128x128xbf16>
    %cst_51 = arith.constant dense<0.000000e+00> : vector<40x128xf32>
    %43 = tpu.matmul %40, %42, %cst_51 {dimension_numbers = #tpu.dot_dimension_numbers<[1], [0], [0], [1], [0, 0, 1, 1], [], []>} : vector<40x128xbf16>, vector<128x128xbf16>, vector<40x128xf32> -> vector<40x128xf32>
    %44 = arith.addf %38, %43 : vector<40x128xf32>
    %c0_52 = arith.constant 0 : index
    %c0_53 = arith.constant 0 : index
    %45 = vector.load %arg6[%c0_52, %c0_53] : memref<40x128xf32, #tpu.memory_space<vmem>>, vector<40x128xf32>
    tpu.vector_store %arg6[%c0_52, %c0_53], %44 {strides = array<i32>} : memref<40x128xf32, #tpu.memory_space<vmem>>, vector<40x128xf32>,
    %c0_54 = arith.constant 0 : index
    %c0_55 = arith.constant 0 : index
    %46 = vector.load %arg6[%c0_54, %c0_55] : memref<40x128xf32, #tpu.memory_space<vmem>>, vector<40x128xf32>
    %c0_56 = arith.constant 0 : index
    %c20 = arith.constant 20 : index
    %c0_57 = arith.constant 0 : index
    %47 = vector.load %arg2[%c0_56, %c20, %c0_57] : memref<1x64x128xbf16, #tpu.memory_space<vmem>>, vector<1x40x128xbf16>
    %48 = vector.shape_cast %47 : vector<1x40x128xbf16> to vector<40x128xbf16>
    %c6 = arith.constant 6 : index
    %c0_58 = arith.constant 0 : index
    %c0_59 = arith.constant 0 : index
    %49 = vector.load %arg3[%c6, %c0_58, %c0_59] : memref<9x128x128xbf16, #tpu.memory_space<vmem>>, vector<1x128x128xbf16>
    %50 = vector.shape_cast %49 : vector<1x128x128xbf16> to vector<128x128xbf16>
    %cst_60 = arith.constant dense<0.000000e+00> : vector<40x128xf32>
    %51 = tpu.matmul %48, %50, %cst_60 {dimension_numbers = #tpu.dot_dimension_numbers<[1], [0], [0], [1], [0, 0, 1, 1], [], []>} : vector<40x128xbf16>, vector<128x128xbf16>, vector<40x128xf32> -> vector<40x128xf32>
    %52 = arith.addf %46, %51 : vector<40x128xf32>
    %c0_61 = arith.constant 0 : index
    %c0_62 = arith.constant 0 : index
    %53 = vector.load %arg6[%c0_61, %c0_62] : memref<40x128xf32, #tpu.memory_space<vmem>>, vector<40x128xf32>
    tpu.vector_store %arg6[%c0_61, %c0_62], %52 {strides = array<i32>} : memref<40x128xf32, #tpu.memory_space<vmem>>, vector<40x128xf32>,
    %c0_63 = arith.constant 0 : index
    %c0_64 = arith.constant 0 : index
    %54 = vector.load %arg6[%c0_63, %c0_64] : memref<40x128xf32, #tpu.memory_space<vmem>>, vector<40x128xf32>
    %c0_65 = arith.constant 0 : index
    %c21 = arith.constant 21 : index
    %c0_66 = arith.constant 0 : index
    %55 = vector.load %arg2[%c0_65, %c21, %c0_66] : memref<1x64x128xbf16, #tpu.memory_space<vmem>>, vector<1x40x128xbf16>
    %56 = vector.shape_cast %55 : vector<1x40x128xbf16> to vector<40x128xbf16>
    %c7 = arith.constant 7 : index
    %c0_67 = arith.constant 0 : index
    %c0_68 = arith.constant 0 : index
    %57 = vector.load %arg3[%c7, %c0_67, %c0_68] : memref<9x128x128xbf16, #tpu.memory_space<vmem>>, vector<1x128x128xbf16>
    %58 = vector.shape_cast %57 : vector<1x128x128xbf16> to vector<128x128xbf16>
    %cst_69 = arith.constant dense<0.000000e+00> : vector<40x128xf32>
    %59 = tpu.matmul %56, %58, %cst_69 {dimension_numbers = #tpu.dot_dimension_numbers<[1], [0], [0], [1], [0, 0, 1, 1], [], []>} : vector<40x128xbf16>, vector<128x128xbf16>, vector<40x128xf32> -> vector<40x128xf32>
    %60 = arith.addf %54, %59 : vector<40x128xf32>
    %c0_70 = arith.constant 0 : index
    %c0_71 = arith.constant 0 : index
    %61 = vector.load %arg6[%c0_70, %c0_71] : memref<40x128xf32, #tpu.memory_space<vmem>>, vector<40x128xf32>
    tpu.vector_store %arg6[%c0_70, %c0_71], %60 {strides = array<i32>} : memref<40x128xf32, #tpu.memory_space<vmem>>, vector<40x128xf32>,
    %c0_72 = arith.constant 0 : index
    %c0_73 = arith.constant 0 : index
    %62 = vector.load %arg6[%c0_72, %c0_73] : memref<40x128xf32, #tpu.memory_space<vmem>>, vector<40x128xf32>
    %c0_74 = arith.constant 0 : index
    %c22 = arith.constant 22 : index
    %c0_75 = arith.constant 0 : index
    %63 = vector.load %arg2[%c0_74, %c22, %c0_75] : memref<1x64x128xbf16, #tpu.memory_space<vmem>>, vector<1x40x128xbf16>
    %64 = vector.shape_cast %63 : vector<1x40x128xbf16> to vector<40x128xbf16>
    %c8 = arith.constant 8 : index
    %c0_76 = arith.constant 0 : index
    %c0_77 = arith.constant 0 : index
    %65 = vector.load %arg3[%c8, %c0_76, %c0_77] : memref<9x128x128xbf16, #tpu.memory_space<vmem>>, vector<1x128x128xbf16>
    %66 = vector.shape_cast %65 : vector<1x128x128xbf16> to vector<128x128xbf16>
    %cst_78 = arith.constant dense<0.000000e+00> : vector<40x128xf32>
    %67 = tpu.matmul %64, %66, %cst_78 {dimension_numbers = #tpu.dot_dimension_numbers<[1], [0], [0], [1], [0, 0, 1, 1], [], []>} : vector<40x128xbf16>, vector<128x128xbf16>, vector<40x128xf32> -> vector<40x128xf32>
    %68 = arith.addf %62, %67 : vector<40x128xf32>
    %c0_79 = arith.constant 0 : index
    %c0_80 = arith.constant 0 : index
    %69 = vector.load %arg6[%c0_79, %c0_80] : memref<40x128xf32, #tpu.memory_space<vmem>>, vector<40x128xf32>
    tpu.vector_store %arg6[%c0_79, %c0_80], %68 {strides = array<i32>} : memref<40x128xf32, #tpu.memory_space<vmem>>, vector<40x128xf32>,
    %c0_81 = arith.constant 0 : index
    %c0_82 = arith.constant 0 : index
    %70 = vector.load %arg6[%c0_81, %c0_82] : memref<40x128xf32, #tpu.memory_space<vmem>>, vector<40x128xf32>
    %c0_83 = arith.constant 0 : index
    %c0_84 = arith.constant 0 : index
    %71 = vector.load %arg4[%c0_83, %c0_84] : memref<1x128xf32, #tpu.memory_space<vmem>>, vector<1x128xf32>
    %72 = vector.broadcast %71 : vector<1x128xf32> to vector<40x128xf32>
    %73 = arith.addf %70, %72 : vector<40x128xf32>
    %cst_85 = arith.constant 0.000000e+00 : f32
    %74 = vector.broadcast %cst_85 : f32 to vector<40x128xf32>
    %75 = arith.maximumf %73, %74 : vector<40x128xf32>
    %76 = arith.truncf %75 : vector<40x128xf32> to vector<40x128xbf16>
    %c0_86 = arith.constant 0 : index
    %c0_87 = arith.constant 0 : index
    %c0_88 = arith.constant 0 : index
    %77 = vector.load %arg5[%c0_86, %c0_87, %c0_88] : memref<1x40x128xbf16, #tpu.memory_space<vmem>>, vector<1x40x128xbf16>
    %78 = vector.shape_cast %77 : vector<1x40x128xbf16> to vector<40x128xbf16>
    %79 = vector.shape_cast %76 : vector<40x128xbf16> to vector<1x40x128xbf16>
    tpu.vector_store %arg5[%c0_86, %c0_87, %c0_88], %79 {strides = array<i32>} : memref<1x40x128xbf16, #tpu.memory_space<vmem>>, vector<1x40x128xbf16>,
    return
  }
  func.func @transform_0(%arg0: i32, %arg1: i32) -> (i32, i32, i32) {
    %c0_i32 = arith.constant 0 : i32
    %c0_i32_0 = arith.constant 0 : i32
    %c0_i32_1 = arith.constant 0 : i32
    return %arg1, %c0_i32, %c0_i32_0 : i32, i32, i32
  }
  func.func @transform_1(%arg0: i32, %arg1: i32) -> (i32, i32, i32) {
    %c0_i32 = arith.constant 0 : i32
    %c0_i32_0 = arith.constant 0 : i32
    %c0_i32_1 = arith.constant 0 : i32
    return %c0_i32, %c0_i32_0, %arg0 : i32, i32, i32
  }
  func.func @transform_2(%arg0: i32, %arg1: i32) -> (i32, i32) {
    %c0_i32 = arith.constant 0 : i32
    %c0_i32_0 = arith.constant 0 : i32
    return %c0_i32, %arg0 : i32, i32
  }
  func.func @transform_3(%arg0: i32, %arg1: i32) -> (i32, i32, i32) {
    %c0_i32 = arith.constant 0 : i32
    %c0_i32_0 = arith.constant 0 : i32
    return %arg1, %c0_i32, %arg0 : i32, i32, i32
  }
}

</mosaic_0001>

<llo_original>
// kernel: tpu_custom_call.1
$region0: #{tpu_custom_call.1}
  #allocation0 [shape = 'u32[]', space=smem, size = 0x4, offset = 0x4, fixed_abs, tag = 'smem constant byte address 0x4 - core index']
  #allocation1 [shape = 'u32[144,128]{1,0:T(1,128)}', space=vmem, size = 0x12000, scoped, tag = 'internal scratch']
  #allocation2 [shape = 'f32[40,128]{1,0:T(8,128)}', space=vmem, size = 0x5000, scoped, tag = 'scratch operand']
  %s0 = inlined_call_operand.hbm [shape: bf16[2,64,128], index: 0, kind: input, shape index: {}]
  %s1 = inlined_call_operand.hbm [shape: bf16[9,128,128], index: 1, kind: input, shape index: {}]
  %s2 = inlined_call_operand.vmem [shape: f32[1,128], index: 2, kind: input, shape index: {}]
  %s3 = inlined_call_operand.hbm [shape: bf16[2,40,128], index: 3, kind: output, shape index: {}]
  %s4 = sld [smem:[#allocation0]]
  $region53: #{tpu_custom_call.1} parent=0
    _
  %s6 = ssub.s32 1, %s4
  %s7 = scalar_select 0, %s6, %s4
  $region1: #{tpu_custom_call.1} parent=0
    #allocation3 [shape = 'u8[32768]{0}', space=vmem, size = 0x8000, scoped, tag = 'input window, operand 0']
    #allocation4 [shape = 's32[2]{0}', space=sflag, size = 0x8, scoped, tag = 'scoped memory for tpu_custom_call.1']
    #allocation5 [shape = 's32[2]{0}', space=sflag, size = 0x8, scoped, tag = 'scoped memory for tpu_custom_call.1']
    #allocation6 [shape = 'u8[294912]{0}', space=vmem, size = 0x48000, scoped, tag = 'input window, operand 1, single buffered']
    #allocation7 [shape = 's32[1]{0}', space=sflag, size = 0x4, scoped, tag = 'scoped memory for tpu_custom_call.1']
    #allocation8 [shape = 'u8[20480]{0}', space=vmem, size = 0x5000, scoped, tag = 'output window, operand 0']
    %8 = vsyncpa [#allocation4], 0
    %s9 = scalar_lea.sflag [#allocation4], 1
    %10 = vsyncpa %s9, 0
    %11 = vsyncpa [#allocation7], 0
    %12 = vsyncpa [#allocation5], 0
    %s13 = scalar_lea.sflag [#allocation5], 1
    %14 = vsyncpa %s13, 0
    loop: start=0, step=1, limit=4
    $region2: #{tpu_custom_call.1} parent=1 // loop_pre_header
      _
    $region3: #{tpu_custom_call.1} parent=1 // loop_header
      %s16 = sphi 0, %s20
      %p17 = scmp.ge.s32.totalorder %s16, 4
      %s23 = sphi 0, %s35
      %s24 = sphi 0, %s31
      %s25 = sphi 0, %s23
      %s26 = sphi 0, %s24
      %s27 = sphi 0, %s25
      %s28 = sphi 0, %s26
      %s38 = sphi 0, %s40
      %s41 = sphi 0, %s38
      %s42 = sphi 0, %s41
      %s58 = sphi 0, %s42
      %s64 = sphi 0, %s66
      %s67 = sphi 0, %s64
      %s68 = sphi 0, %s67
      %s84 = sphi 0, %s68
      %s90 = sphi 0, %s92
      %s93 = sphi 0, %s90
      %s94 = sphi 0, %s93
      %s110 = sphi 0, %s94
      %s118 = sphi 0, %s120
      %s121 = sphi 0, %s118
      %s122 = sphi 0, %s121
      %s138 = sphi 0, %s122
    $region4: #{tpu_custom_call.1} parent=1 // loop_header_branch
      %19 = sbr.rel (%p17) target = $region8
    $region5: #{tpu_custom_call.1} parent=1 // loop_body
      %s21 = ssub.s32 %s16, 1
      %s22 = ssub.s32 %s16, 2
      %s29 = sadd.s32 1, %s24
      %p30 = scmp.ge.s32.totalorder %s29, 2
      %s31 = scalar_select %p30, 0, %s29
      %s32 = sadd.s32 1, %s23
      %s33 = scalar_select %p30, %s32, %s23
      %p34 = scmp.ge.s32.totalorder %s33, 1
      %s35 = scalar_select %p34, 0, %s33
      %s36 = ssub.s32 %s24, %s31
      %p37 = scmp.eq.s32.totalorder %s36, 0
      %s39 = sadd.s32 %s38, 1
      %s40 = scalar_select %p37, %s38, %s39
      %p43 = pneg %p37
      %p44 = scmp.eq.s32.totalorder %s16, 1
      %p45 = por %p43, %p44
      %p46 = scmp.ne.s32.totalorder %s38, %s41
      %p47 = scmp.eq.s32.totalorder %s16, 0
      %p48 = por %p46, %p47
      %p49 = scmp.ne.s32.totalorder %s38, %s41
      %p50 = scmp.eq.s32.totalorder %s21, 1
      %p51 = por %p49, %p50
      %p52 = scmp.ne.s32.totalorder %s41, %s42
      %p53 = scmp.eq.s32.totalorder %s21, 0
      %p54 = por %p52, %p53
      %p55 = scmp.ne.s32.totalorder %s41, %s42
      %p56 = scmp.eq.s32.totalorder %s22, 1
      %p57 = por %p55, %p56
      %p59 = scmp.ne.s32.totalorder %s42, %s58
      %p60 = scmp.eq.s32.totalorder %s22, 0
      %p61 = por %p59, %p60
      %s62 = ssub.s32 %s23, %s35
      %p63 = scmp.eq.s32.totalorder %s62, 0
      %s65 = sadd.s32 %s64, 1
      %s66 = scalar_select %p63, %s64, %s65
      %p69 = pneg %p63
      %p70 = scmp.eq.s32.totalorder %s16, 1
      %p71 = por %p69, %p70
      %p72 = scmp.ne.s32.totalorder %s64, %s67
      %p73 = scmp.eq.s32.totalorder %s16, 0
      %p74 = por %p72, %p73
      %p75 = scmp.ne.s32.totalorder %s64, %s67
      %p76 = scmp.eq.s32.totalorder %s21, 1
      %p77 = por %p75, %p76
      %p78 = scmp.ne.s32.totalorder %s67, %s68
      %p79 = scmp.eq.s32.totalorder %s21, 0
      %p80 = por %p78, %p79
      %p81 = scmp.ne.s32.totalorder %s67, %s68
      %p82 = scmp.eq.s32.totalorder %s22, 1
      %p83 = por %p81, %p82
      %p85 = scmp.ne.s32.totalorder %s68, %s84
      %p86 = scmp.eq.s32.totalorder %s22, 0
      %p87 = por %p85, %p86
      %s88 = ssub.s32 %s23, %s35
      %p89 = scmp.eq.s32.totalorder %s88, 0
      %s91 = sadd.s32 %s90, 1
      %s92 = scalar_select %p89, %s90, %s91
      %p95 = pneg %p89
      %p96 = scmp.eq.s32.totalorder %s16, 1
      %p97 = por %p95, %p96
      %p98 = scmp.ne.s32.totalorder %s90, %s93
      %p99 = scmp.eq.s32.totalorder %s16, 0
      %p100 = por %p98, %p99
      %p101 = scmp.ne.s32.totalorder %s90, %s93
      %p102 = scmp.eq.s32.totalorder %s21, 1
      %p103 = por %p101, %p102
      %p104 = scmp.ne.s32.totalorder %s93, %s94
      %p105 = scmp.eq.s32.totalorder %s21, 0
      %p106 = por %p104, %p105
      %p107 = scmp.ne.s32.totalorder %s93, %s94
      %p108 = scmp.eq.s32.totalorder %s22, 1
      %p109 = por %p107, %p108
      %p111 = scmp.ne.s32.totalorder %s94, %s110
      %p112 = scmp.eq.s32.totalorder %s22, 0
      %p113 = por %p111, %p112
      %s114 = ssub.s32 %s24, %s31
      %s115 = ssub.s32 %s23, %s35
      %s116 = sor.u32 %s114, %s115
      %p117 = scmp.eq.s32.totalorder %s116, 0
      %s119 = sadd.s32 %s118, 1
      %s120 = scalar_select %p117, %s118, %s119
      %p123 = pneg %p117
      %p124 = scmp.eq.s32.totalorder %s16, 1
      %p125 = por %p123, %p124
      %p126 = scmp.ne.s32.totalorder %s118, %s121
      %p127 = scmp.eq.s32.totalorder %s16, 0
      %p128 = por %p126, %p127
      %p129 = scmp.ne.s32.totalorder %s118, %s121
      %p130 = scmp.eq.s32.totalorder %s21, 1
      %p131 = por %p129, %p130
      %p132 = scmp.ne.s32.totalorder %s121, %s122
      %p133 = scmp.eq.s32.totalorder %s21, 0
      %p134 = por %p132, %p133
      %p135 = scmp.ne.s32.totalorder %s121, %s122
      %p136 = scmp.eq.s32.totalorder %s22, 1
      %p137 = por %p135, %p136
      %p139 = scmp.ne.s32.totalorder %s122, %s138
      %p140 = scmp.eq.s32.totalorder %s22, 0
      %p141 = por %p139, %p140
      %p142 = scmp.le.s32.totalorder 1, %s16
      %p143 = scmp.lt.s32.totalorder %s16, 3
      %p144 = pnand %p142, %p143
      %p145 = pneg %p144
      // Predicated region
      $region9: #{tpu_custom_call.1} parent=5 // pred_check
        _
      $region10: #{tpu_custom_call.1} parent=5 // pred_check_branch
        %147 = sbr.rel (%p144) target = $region12
      $region11: #{tpu_custom_call.1} parent=5 // pred_region
        %s148 = ssub.s32 %s16, 1
        // Predicated region
        $region13: #{tpu_custom_call.1} parent=11 // pred_check
          %p149 = pneg %p80
        $region14: #{tpu_custom_call.1} parent=11 // pred_check_branch
          %151 = sbr.rel (%p149) target = $region16
        $region15: #{tpu_custom_call.1} parent=11 // pred_region
          %s153 = ssub.s32 9216, 9216
          %154 = vsyncadd [#allocation7], %s153
          %s155 = smul.addr %s25, 64
          %s156 = scalar_lea.hbm %s1, %s155
          %s157 = sshll.u32 [#allocation6], 4
          %s158 = int_to_ptr.vmem [resolvable:$true] %s157
          %163 = dma.hbm_to_vmem [thread:$0]  %s156, 9216, %s158, [#allocation7], 64, 64, 4
        $region16: #{tpu_custom_call.1} parent=11 // pred_fallthru
          _
        // Predicated region
        $region17: #{tpu_custom_call.1} parent=11 // pred_check
          %p164 = pneg %p106
        $region18: #{tpu_custom_call.1} parent=11 // pred_check_branch
          %166 = sbr.rel (%p164) target = $region20
        $region19: #{tpu_custom_call.1} parent=11 // pred_region
          %p167 = scmp.lt.s32.totalorder %s25, 0
          %s168 = scalar_select %p167, %s25, 0
          %s169 = scalar_lea.vmem %s2, %s168
        $region20: #{tpu_custom_call.1} parent=11 // pred_fallthru
          _
      $region12: #{tpu_custom_call.1} parent=5 // pred_fallthru
        _
      %p170 = scmp.lt.s32.totalorder %s16, 2
      // Predicated region
      $region21: #{tpu_custom_call.1} parent=5 // pred_check
        %p171 = pneg %p170
      $region22: #{tpu_custom_call.1} parent=5 // pred_check_branch
        %173 = sbr.rel (%p171) target = $region24
      $region23: #{tpu_custom_call.1} parent=5 // pred_region
        // Predicated region
        $region25: #{tpu_custom_call.1} parent=23 // pred_check
          %p174 = pneg %p48
        $region26: #{tpu_custom_call.1} parent=23 // pred_check_branch
          %176 = sbr.rel (%p174) target = $region28
        $region27: #{tpu_custom_call.1} parent=23 // pred_region
          %s177 = sand.u32 %s38, 1
          %s178 = scalar_lea.sflag [#allocation4], %s177
          %s179 = sand.u32 %s38, 1
          %s180 = smul.addr %s179, 32
          %s181 = scalar_lea.vmem [#allocation3], %s180
          %s183 = ssub.s32 512, 512
          %184 = vsyncadd %s178, %s183
          %s185 = smul.addr %s24, 8
          %s186 = smul.addr %s185, 64
          %s187 = scalar_lea.hbm %s0, %s186
          %s188 = sshll.u32 %s181, 4
          %s189 = int_to_ptr.vmem [resolvable:$true] %s188
          %194 = dma.hbm_to_vmem [thread:$0]  %s187, 512, %s189, %s178, 64, 64, 4
        $region28: #{tpu_custom_call.1} parent=23 // pred_fallthru
          _
      $region24: #{tpu_custom_call.1} parent=5 // pred_fallthru
        _
      %p195 = scmp.le.s32.totalorder 1, %s16
      %p196 = scmp.lt.s32.totalorder %s16, 3
      %p197 = pnand %p195, %p196
      %p198 = pneg %p197
      // Predicated region
      $region29: #{tpu_custom_call.1} parent=5 // pred_check
        _
      $region30: #{tpu_custom_call.1} parent=5 // pred_check_branch
        %200 = sbr.rel (%p197) target = $region32
      $region31: #{tpu_custom_call.1} parent=5 // pred_region
        %s201 = ssub.s32 %s16, 1
        %s202 = sand.u32 %s41, 1
        %s203 = scalar_lea.sflag [#allocation4], %s202
        %s204 = sand.u32 %s41, 1
        %s205 = smul.addr %s204, 32
        %s206 = scalar_lea.vmem [#allocation3], %s205
        // Predicated region
        $region33: #{tpu_custom_call.1} parent=31 // pred_check
          %p207 = pneg %p54
        $region34: #{tpu_custom_call.1} parent=31 // pred_check_branch
          %209 = sbr.rel (%p207) target = $region36
        $region35: #{tpu_custom_call.1} parent=31 // pred_region
          %210 = dma.done %s203, 512
        $region36: #{tpu_custom_call.1} parent=31 // pred_fallthru
          _
        // Predicated region
        $region37: #{tpu_custom_call.1} parent=31 // pred_check
          %p211 = pneg %p80
        $region38: #{tpu_custom_call.1} parent=31 // pred_check_branch
          %213 = sbr.rel (%p211) target = $region40
        $region39: #{tpu_custom_call.1} parent=31 // pred_region
          %214 = dma.done [#allocation7], 9216
        $region40: #{tpu_custom_call.1} parent=31 // pred_fallthru
          _
        %s215 = sand.u32 %s41, 1
        %s216 = scalar_lea.sflag [#allocation4], %s215
        %s217 = sand.u32 %s41, 1
        %s218 = smul.addr %s217, 32
        %s219 = scalar_lea.vmem [#allocation3], %s218
        %p220 = pneg %p54
        %p221 = pneg %p51
        %p222 = pneg %p80
        %p223 = pneg %p77
        %p224 = scmp.lt.s32.totalorder %s25, 0
        %s225 = scalar_select %p224, %s25, 0
        %s226 = scalar_lea.vmem %s2, %s225
        %p227 = pneg %p106
        %p228 = pneg %p103
        %p229 = pneg %p134
        %p230 = pneg %p131
        %s231 = sand.u32 %s121, 1
        %s232 = scalar_lea.sflag [#allocation5], %s231
        %s233 = sand.u32 %s121, 1
        %s234 = smul.addr %s233, 20
        %s235 = scalar_lea.vmem [#allocation8], %s234
        %p236 = scmp.lt.s32.totalorder %s25, 0
        %s237 = scalar_select %p236, %s25, 0
        %s238 = scalar_lea.vmem %s2, %s237
        %v240 = vld [vmem:[%s206] sm:$0xf]
        %v241 = vld [vmem:[%s206 + $0x4] sm:$0xf]
        %v242 = vld [vmem:[%s206 + $0x8] sm:$0xf]
        %v243 = vld [vmem:[%s206 + $0xc] sm:$0xf]
        %v244 = vld [vmem:[%s206 + $0x10] sm:$0xf]
        %v245 = vld [vmem:[#allocation6] sm:$0xf]
        %v246 = vld [vmem:[#allocation6 + $0x4] sm:$0xf]
        %v247 = vld [vmem:[#allocation6 + $0x8] sm:$0xf]
        %v248 = vld [vmem:[#allocation6 + $0xc] sm:$0xf]
        %v249 = vld [vmem:[#allocation6 + $0x10] sm:$0xf]
        %v250 = vld [vmem:[#allocation6 + $0x14] sm:$0xf]
        %v251 = vld [vmem:[#allocation6 + $0x18] sm:$0xf]
        %v252 = vld [vmem:[#allocation6 + $0x1c] sm:$0xf]
        %v253 = vld [vmem:[#allocation6 + $0x20] sm:$0xf]
        %v254 = vld [vmem:[#allocation6 + $0x24] sm:$0xf]
        %v255 = vld [vmem:[#allocation6 + $0x28] sm:$0xf]
        %v256 = vld [vmem:[#allocation6 + $0x2c] sm:$0xf]
        %v257 = vld [vmem:[#allocation6 + $0x30] sm:$0xf]
        %v258 = vld [vmem:[#allocation6 + $0x34] sm:$0xf]
        %v259 = vld [vmem:[#allocation6 + $0x38] sm:$0xf]
        %v260 = vld [vmem:[#allocation6 + $0x3c] sm:$0xf]
        %v266 = vunpack.c.l.b16 %v240
        %v267 = vunpack.c.l.b16 %v241
        %v268 = vunpack.c.l.b16 %v242
        %v269 = vunpack.c.l.b16 %v243
        %v270 = vunpack.c.l.b16 %v244
        %v271 = vpack.c.b16 %v267, %v266
        %v272 = vpack.c.b16 %v269, %v268
        %v273 = vpack.c.b16 %v270, %v270
        %v293 = vunpack.c.l.b16 %v245
        %v294 = vunpack.c.l.b16 %v246
        %v295 = vunpack.c.l.b16 %v247
        %v296 = vunpack.c.l.b16 %v248
        %v297 = vunpack.c.l.b16 %v249
        %v298 = vunpack.c.l.b16 %v250
        %v299 = vunpack.c.l.b16 %v251
        %v300 = vunpack.c.l.b16 %v252
        %v301 = vunpack.c.l.b16 %v253
        %v302 = vunpack.c.l.b16 %v254
        %v303 = vunpack.c.l.b16 %v255
        %v304 = vunpack.c.l.b16 %v256
        %v305 = vunpack.c.l.b16 %v257
        %v306 = vunpack.c.l.b16 %v258
        %v307 = vunpack.c.l.b16 %v259
        %v308 = vunpack.c.l.b16 %v260
        %v309 = vpack.c.b16 %v294, %v293
        %v310 = vpack.c.b16 %v296, %v295
        %v311 = vpack.c.b16 %v298, %v297
        %v312 = vpack.c.b16 %v300, %v299
        %v313 = vpack.c.b16 %v302, %v301
        %v314 = vpack.c.b16 %v304, %v303
        %v315 = vpack.c.b16 %v306, %v305
        %v316 = vpack.c.b16 %v308, %v307
        %325 = vmatprep.subr.bf16.mxu0 0
        %326 = vmatpush1.bf16.msra.mxu0 %v309
        %327 = vmatprep.subr.bf16.mxu0 0
        %328 = vmatpush1.bf16.msra.mxu0 %v310
        %329 = vmatprep.subr.bf16.mxu0 0
        %330 = vmatpush1.bf16.msra.mxu0 %v311
        %331 = vmatprep.subr.bf16.mxu0 0
        %332 = vmatpush1.bf16.msra.mxu0 %v312
        %333 = vmatprep.subr.bf16.mxu0 0
        %334 = vmatpush1.bf16.msra.mxu0 %v313
        %335 = vmatprep.subr.bf16.mxu0 0
        %336 = vmatpush1.bf16.msra.mxu0 %v314
        %337 = vmatprep.subr.bf16.mxu0 0
        %338 = vmatpush1.bf16.msra.mxu0 %v315
        %339 = vmatprep.subr.bf16.mxu0 0
        %340 = vmatpush1.bf16.msra.mxu0 %v316
        %341 = vmatprep.subr.bf16.mxu0 0
        %342 = vmatpush1.bf16.msra.mxu0 0
        %343 = vmatprep.subr.bf16.mxu0 0
        %344 = vmatpush1.bf16.msra.mxu0 0
        %345 = vmatprep.subr.bf16.mxu0 0
        %346 = vmatpush1.bf16.msra.mxu0 0
        %347 = vmatprep.subr.bf16.mxu0 0
        %348 = vmatpush1.bf16.msra.mxu0 0
        %349 = vmatprep.subr.bf16.mxu0 0
        %350 = vmatpush1.bf16.msra.mxu0 0
        %351 = vmatprep.subr.bf16.mxu0 0
        %352 = vmatpush1.bf16.msra.mxu0 0
        %353 = vmatprep.subr.bf16.mxu0 0
        %354 = vmatpush1.bf16.msra.mxu0 0
        %355 = vmatprep.subr.bf16.mxu0 0
        %356 = vmatpush1.bf16.msra.mxu0 0
        %357 = vmatprep.mubr.bf16.mxu0 0
        %358 = vmatmul.mubr.bf16.gmra.mrb[0].mxu0 %v271
        %v359 = vpop.f32.mrb[0].mxu0
        %v360 = vadd.f32 0.0, %v359
        %v361 = vpop.f32.mrb[0].mxu0
        %v362 = vpop.f32.mrb[0].mxu0
        %v363 = vadd.f32 0.0, %v362
        %v364 = vpop.f32.mrb[0].mxu0
        %365 = vmatprep.mubr.bf16.mxu0 0
        %366 = vmatmul.mubr.bf16.gmra.mrb[0].mxu0 %v272
        %v367 = vpop.f32.mrb[0].mxu0
        %v368 = vadd.f32 0.0, %v367
        %v369 = vpop.f32.mrb[0].mxu0
        %v370 = vpop.f32.mrb[0].mxu0
        %v371 = vadd.f32 0.0, %v370
        %v372 = vpop.f32.mrb[0].mxu0
        %373 = vmatprep.mubr.bf16.mxu0 0
        %374 = vmatmul.mubr.bf16.gmra.mrb[0].mxu0 %v273
        %v375 = vpop.f32.mrb[0].mxu0
        %v376 = vadd.f32 0.0, %v375
        %v377 = vpop.f32.mrb[0].mxu0
        %v378 = vpop.f32.mrb[0].mxu0
        %v379 = vpop.f32.mrb[0].mxu0
        %380 = vdwg.mxu0
        %381 = vst [vmem:[#allocation2] sm:$0xff] %v360
        %382 = vst [vmem:[#allocation2 + $0x8] sm:$0xff] %v363
        %383 = vst [vmem:[#allocation2 + $0x10] sm:$0xff] %v368
        %384 = vst [vmem:[#allocation2 + $0x18] sm:$0xff] %v371
        %385 = vst [vmem:[#allocation2 + $0x20] sm:$0xff] %v376
        %v386 = vld [vmem:[#allocation2] sm:$0xff]
        %v387 = vld [vmem:[#allocation2 + $0x8] sm:$0xff]
        %v388 = vld [vmem:[#allocation2 + $0x10] sm:$0xff]
        %v389 = vld [vmem:[#allocation2 + $0x18] sm:$0xff]
        %v390 = vld [vmem:[#allocation2 + $0x20] sm:$0xff]
        %v391 = vld [vmem:[%s206] sm:$0xf]
        %v392 = vld [vmem:[%s206 + $0x4] sm:$0xf]
        %v393 = vld [vmem:[%s206 + $0x8] sm:$0xf]
        %v394 = vld [vmem:[%s206 + $0xc] sm:$0xf]
        %v395 = vld [vmem:[%s206 + $0x10] sm:$0xf]
        %v396 = vld [vmem:[%s206 + $0x14] sm:$0x1]
        %s397 = scalar_lea.vmem [#allocation6], 64
        %v398 = vld [vmem:[%s397] sm:$0xf]
        %v399 = vld [vmem:[%s397 + $0x4] sm:$0xf]
        %v400 = vld [vmem:[%s397 + $0x8] sm:$0xf]
        %v401 = vld [vmem:[%s397 + $0xc] sm:$0xf]
        %v402 = vld [vmem:[%s397 + $0x10] sm:$0xf]
        %v403 = vld [vmem:[%s397 + $0x14] sm:$0xf]
        %v404 = vld [vmem:[%s397 + $0x18] sm:$0xf]
        %v405 = vld [vmem:[%s397 + $0x1c] sm:$0xf]
        %v406 = vld [vmem:[%s397 + $0x20] sm:$0xf]
        %v407 = vld [vmem:[%s397 + $0x24] sm:$0xf]
        %v408 = vld [vmem:[%s397 + $0x28] sm:$0xf]
        %v409 = vld [vmem:[%s397 + $0x2c] sm:$0xf]
        %v410 = vld [vmem:[%s397 + $0x30] sm:$0xf]
        %v411 = vld [vmem:[%s397 + $0x34] sm:$0xf]
        %v412 = vld [vmem:[%s397 + $0x38] sm:$0xf]
        %v413 = vld [vmem:[%s397 + $0x3c] sm:$0xf]
        %v420 = vunpack.c.l.b16 %v391
        %v421 = vunpack.c.l.b16 %v392
        %v422 = vunpack.c.l.b16 %v393
        %v423 = vunpack.c.l.b16 %v394
        %v424 = vunpack.c.l.b16 %v395
        %v425 = vunpack.c.l.b16 %v396
        %v426 = vpack.c.b16 %v421, %v420
        %v427 = vpack.c.b16 %v423, %v422
        %v428 = vpack.c.b16 %v425, %v424
        %vm429 = vsmask.f32 7424
        %v431 = vshrl.u32 %v426, 16
        %v433 = vshll.u32 %v426, 16
        %v435 = vrot.slane %v433, 1
        %v436 = vor.u32 %v431, %v435
        %v438 = vshll.u32 %v427, 16
        %v440 = vrot.slane %v438, 1
        %v441 = vsel %vm429, %v436, %v440
        %v442 = vshrl.u32 %v427, 16
        %v444 = vor.u32 %v442, %v440
        %v446 = vshll.u32 %v428, 16
        %v448 = vrot.slane %v446, 1
        %v449 = vsel %vm429, %v444, %v448
        %v450 = vshrl.u32 %v428, 16
        %v452 = vor.u32 %v450, %v448
        %v472 = vunpack.c.l.b16 %v398
        %v473 = vunpack.c.l.b16 %v399
        %v474 = vunpack.c.l.b16 %v400
        %v475 = vunpack.c.l.b16 %v401
        %v476 = vunpack.c.l.b16 %v402
        %v477 = vunpack.c.l.b16 %v403
        %v478 = vunpack.c.l.b16 %v404
        %v479 = vunpack.c.l.b16 %v405
        %v480 = vunpack.c.l.b16 %v406
        %v481 = vunpack.c.l.b16 %v407
        %v482 = vunpack.c.l.b16 %v408
        %v483 = vunpack.c.l.b16 %v409
        %v484 = vunpack.c.l.b16 %v410
        %v485 = vunpack.c.l.b16 %v411
        %v486 = vunpack.c.l.b16 %v412
        %v487 = vunpack.c.l.b16 %v413
        %v488 = vpack.c.b16 %v473, %v472
        %v489 = vpack.c.b16 %v475, %v474
        %v490 = vpack.c.b16 %v477, %v476
        %v491 = vpack.c.b16 %v479, %v478
        %v492 = vpack.c.b16 %v481, %v480
        %v493 = vpack.c.b16 %v483, %v482
        %v494 = vpack.c.b16 %v485, %v484
        %v495 = vpack.c.b16 %v487, %v486
        %504 = vmatprep.subr.bf16.mxu0 0
        %505 = vmatpush1.bf16.msra.mxu0 %v488
        %506 = vmatprep.subr.bf16.mxu0 0
        %507 = vmatpush1.bf16.msra.mxu0 %v489
        %508 = vmatprep.subr.bf16.mxu0 0
        %509 = vmatpush1.bf16.msra.mxu0 %v490
        %510 = vmatprep.subr.bf16.mxu0 0
        %511 = vmatpush1.bf16.msra.mxu0 %v491
        %512 = vmatprep.subr.bf16.mxu0 0
        %513 = vmatpush1.bf16.msra.mxu0 %v492
        %514 = vmatprep.subr.bf16.mxu0 0
        %515 = vmatpush1.bf16.msra.mxu0 %v493
        %516 = vmatprep.subr.bf16.mxu0 0
        %517 = vmatpush1.bf16.msra.mxu0 %v494
        %518 = vmatprep.subr.bf16.mxu0 0
        %519 = vmatpush1.bf16.msra.mxu0 %v495
        %520 = vmatprep.subr.bf16.mxu0 0
        %521 = vmatpush1.bf16.msra.mxu0 0
        %522 = vmatprep.subr.bf16.mxu0 0
        %523 = vmatpush1.bf16.msra.mxu0 0
        %524 = vmatprep.subr.bf16.mxu0 0
        %525 = vmatpush1.bf16.msra.mxu0 0
        %526 = vmatprep.subr.bf16.mxu0 0
        %527 = vmatpush1.bf16.msra.mxu0 0
        %528 = vmatprep.subr.bf16.mxu0 0
        %529 = vmatpush1.bf16.msra.mxu0 0
        %530 = vmatprep.subr.bf16.mxu0 0
        %531 = vmatpush1.bf16.msra.mxu0 0
        %532 = vmatprep.subr.bf16.mxu0 0
        %533 = vmatpush1.bf16.msra.mxu0 0
        %534 = vmatprep.subr.bf16.mxu0 0
        %535 = vmatpush1.bf16.msra.mxu0 0
        %536 = vmatprep.mubr.bf16.mxu0 0
        %537 = vmatmul.mubr.bf16.gmra.mrb[0].mxu0 %v441
        %v538 = vpop.f32.mrb[0].mxu0
        %v539 = vadd.f32 0.0, %v538
        %v540 = vpop.f32.mrb[0].mxu0
        %v541 = vpop.f32.mrb[0].mxu0
        %v542 = vadd.f32 0.0, %v541
        %v543 = vpop.f32.mrb[0].mxu0
        %544 = vmatprep.mubr.bf16.mxu0 0
        %545 = vmatmul.mubr.bf16.gmra.mrb[0].mxu0 %v449
        %v546 = vpop.f32.mrb[0].mxu0
        %v547 = vadd.f32 0.0, %v546
        %v548 = vpop.f32.mrb[0].mxu0
        %v549 = vpop.f32.mrb[0].mxu0
        %v550 = vadd.f32 0.0, %v549
        %v551 = vpop.f32.mrb[0].mxu0
        %552 = vmatprep.mubr.bf16.mxu0 0
        %553 = vmatmul.mubr.bf16.gmra.mrb[0].mxu0 %v452
        %v554 = vpop.f32.mrb[0].mxu0
        %v555 = vadd.f32 0.0, %v554
        %v556 = vpop.f32.mrb[0].mxu0
        %v557 = vpop.f32.mrb[0].mxu0
        %v558 = vpop.f32.mrb[0].mxu0
        %559 = vdwg.mxu0
        %v560 = vadd.f32 %v386, %v539
        %v561 = vadd.f32 %v387, %v542
        %v562 = vadd.f32 %v388, %v547
        %v563 = vadd.f32 %v389, %v550
        %v564 = vadd.f32 %v390, %v555
        %565 = vst [vmem:[#allocation2] sm:$0xff] %v560
        %566 = vst [vmem:[#allocation2 + $0x8] sm:$0xff] %v561
        %567 = vst [vmem:[#allocation2 + $0x10] sm:$0xff] %v562
        %568 = vst [vmem:[#allocation2 + $0x18] sm:$0xff] %v563
        %569 = vst [vmem:[#allocation2 + $0x20] sm:$0xff] %v564
        %v570 = vld [vmem:[#allocation2] sm:$0xff]
        %v571 = vld [vmem:[#allocation2 + $0x8] sm:$0xff]
        %v572 = vld [vmem:[#allocation2 + $0x10] sm:$0xff]
        %v573 = vld [vmem:[#allocation2 + $0x18] sm:$0xff]
        %v574 = vld [vmem:[#allocation2 + $0x20] sm:$0xff]
        %v575 = vld [vmem:[%s206] sm:$0xe]
        %v576 = vld [vmem:[%s206 + $0x4] sm:$0xf]
        %v577 = vld [vmem:[%s206 + $0x8] sm:$0xf]
        %v578 = vld [vmem:[%s206 + $0xc] sm:$0xf]
        %v579 = vld [vmem:[%s206 + $0x10] sm:$0xf]
        %v580 = vld [vmem:[%s206 + $0x14] sm:$0x1]
        %s581 = scalar_lea.vmem [#allocation6], 128
        %v582 = vld [vmem:[%s581] sm:$0xf]
        %v583 = vld [vmem:[%s581 + $0x4] sm:$0xf]
        %v584 = vld [vmem:[%s581 + $0x8] sm:$0xf]
        %v585 = vld [vmem:[%s581 + $0xc] sm:$0xf]
        %v586 = vld [vmem:[%s581 + $0x10] sm:$0xf]
        %v587 = vld [vmem:[%s581 + $0x14] sm:$0xf]
        %v588 = vld [vmem:[%s581 + $0x18] sm:$0xf]
        %v589 = vld [vmem:[%s581 + $0x1c] sm:$0xf]
        %v590 = vld [vmem:[%s581 + $0x20] sm:$0xf]
        %v591 = vld [vmem:[%s581 + $0x24] sm:$0xf]
        %v592 = vld [vmem:[%s581 + $0x28] sm:$0xf]
        %v593 = vld [vmem:[%s581 + $0x2c] sm:$0xf]
        %v594 = vld [vmem:[%s581 + $0x30] sm:$0xf]
        %v595 = vld [vmem:[%s581 + $0x34] sm:$0xf]
        %v596 = vld [vmem:[%s581 + $0x38] sm:$0xf]
        %v597 = vld [vmem:[%s581 + $0x3c] sm:$0xf]
        %v604 = vunpack.c.l.b16 %v575
        %v605 = vunpack.c.l.b16 %v576
        %v606 = vunpack.c.l.b16 %v577
        %v607 = vunpack.c.l.b16 %v578
        %v608 = vunpack.c.l.b16 %v579
        %v609 = vunpack.c.l.b16 %v580
        %v610 = vpack.c.b16 %v605, %v604
        %v611 = vpack.c.b16 %v607, %v606
        %v612 = vpack.c.b16 %v609, %v608
        %vm613 = vcmask 1046528
        %v614 = vrot.slane %v610, 1
        %v615 = vrot.slane %v611, 1
        %v616 = vsel %vm613, %v614, %v615
        %v617 = vrot.slane %v612, 1
        %v618 = vsel %vm613, %v615, %v617
        %v638 = vunpack.c.l.b16 %v582
        %v639 = vunpack.c.l.b16 %v583
        %v640 = vunpack.c.l.b16 %v584
        %v641 = vunpack.c.l.b16 %v585
        %v642 = vunpack.c.l.b16 %v586
        %v643 = vunpack.c.l.b16 %v587
        %v644 = vunpack.c.l.b16 %v588
        %v645 = vunpack.c.l.b16 %v589
        %v646 = vunpack.c.l.b16 %v590
        %v647 = vunpack.c.l.b16 %v591
        %v648 = vunpack.c.l.b16 %v592
        %v649 = vunpack.c.l.b16 %v593
        %v650 = vunpack.c.l.b16 %v594
        %v651 = vunpack.c.l.b16 %v595
        %v652 = vunpack.c.l.b16 %v596
        %v653 = vunpack.c.l.b16 %v597
        %v654 = vpack.c.b16 %v639, %v638
        %v655 = vpack.c.b16 %v641, %v640
        %v656 = vpack.c.b16 %v643, %v642
        %v657 = vpack.c.b16 %v645, %v644
        %v658 = vpack.c.b16 %v647, %v646
        %v659 = vpack.c.b16 %v649, %v648
        %v660 = vpack.c.b16 %v651, %v650
        %v661 = vpack.c.b16 %v653, %v652
        %670 = vmatprep.subr.bf16.mxu0 0
        %671 = vmatpush1.bf16.msra.mxu0 %v654
        %672 = vmatprep.subr.bf16.mxu0 0
        %673 = vmatpush1.bf16.msra.mxu0 %v655
        %674 = vmatprep.subr.bf16.mxu0 0
        %675 = vmatpush1.bf16.msra.mxu0 %v656
        %676 = vmatprep.subr.bf16.mxu0 0
        %677 = vmatpush1.bf16.msra.mxu0 %v657
        %678 = vmatprep.subr.bf16.mxu0 0
        %679 = vmatpush1.bf16.msra.mxu0 %v658
        %680 = vmatprep.subr.bf16.mxu0 0
        %681 = vmatpush1.bf16.msra.mxu0 %v659
        %682 = vmatprep.subr.bf16.mxu0 0
        %683 = vmatpush1.bf16.msra.mxu0 %v660
        %684 = vmatprep.subr.bf16.mxu0 0
        %685 = vmatpush1.bf16.msra.mxu0 %v661
        %686 = vmatprep.subr.bf16.mxu0 0
        %687 = vmatpush1.bf16.msra.mxu0 0
        %688 = vmatprep.subr.bf16.mxu0 0
        %689 = vmatpush1.bf16.msra.mxu0 0
        %690 = vmatprep.subr.bf16.mxu0 0
        %691 = vmatpush1.bf16.msra.mxu0 0
        %692 = vmatprep.subr.bf16.mxu0 0
        %693 = vmatpush1.bf16.msra.mxu0 0
        %694 = vmatprep.subr.bf16.mxu0 0
        %695 = vmatpush1.bf16.msra.mxu0 0
        %696 = vmatprep.subr.bf16.mxu0 0
        %697 = vmatpush1.bf16.msra.mxu0 0
        %698 = vmatprep.subr.bf16.mxu0 0
        %699 = vmatpush1.bf16.msra.mxu0 0
        %700 = vmatprep.subr.bf16.mxu0 0
        %701 = vmatpush1.bf16.msra.mxu0 0
        %702 = vmatprep.mubr.bf16.mxu0 0
        %703 = vmatmul.mubr.bf16.gmra.mrb[0].mxu0 %v616
        %v704 = vpop.f32.mrb[0].mxu0
        %v705 = vadd.f32 0.0, %v704
        %v706 = vpop.f32.mrb[0].mxu0
        %v707 = vpop.f32.mrb[0].mxu0
        %v708 = vadd.f32 0.0, %v707
        %v709 = vpop.f32.mrb[0].mxu0
        %710 = vmatprep.mubr.bf16.mxu0 0
        %711 = vmatmul.mubr.bf16.gmra.mrb[0].mxu0 %v618
        %v712 = vpop.f32.mrb[0].mxu0
        %v713 = vadd.f32 0.0, %v712
        %v714 = vpop.f32.mrb[0].mxu0
        %v715 = vpop.f32.mrb[0].mxu0
        %v716 = vadd.f32 0.0, %v715
        %v717 = vpop.f32.mrb[0].mxu0
        %718 = vmatprep.mubr.bf16.mxu0 0
        %719 = vmatmul.mubr.bf16.gmra.mrb[0].mxu0 %v617
        %v720 = vpop.f32.mrb[0].mxu0
        %v721 = vadd.f32 0.0, %v720
        %v722 = vpop.f32.mrb[0].mxu0
        %v723 = vpop.f32.mrb[0].mxu0
        %v724 = vpop.f32.mrb[0].mxu0
        %725 = vdwg.mxu0
        %v726 = vadd.f32 %v570, %v705
        %v727 = vadd.f32 %v571, %v708
        %v728 = vadd.f32 %v572, %v713
        %v729 = vadd.f32 %v573, %v716
        %v730 = vadd.f32 %v574, %v721
        %731 = vst [vmem:[#allocation2] sm:$0xff] %v726
        %732 = vst [vmem:[#allocation2 + $0x8] sm:$0xff] %v727
        %733 = vst [vmem:[#allocation2 + $0x10] sm:$0xff] %v728
        %734 = vst [vmem:[#allocation2 + $0x18] sm:$0xff] %v729
        %735 = vst [vmem:[#allocation2 + $0x20] sm:$0xff] %v730
        %v736 = vld [vmem:[#allocation2] sm:$0xff]
        %v737 = vld [vmem:[#allocation2 + $0x8] sm:$0xff]
        %v738 = vld [vmem:[#allocation2 + $0x10] sm:$0xff]
        %v739 = vld [vmem:[#allocation2 + $0x18] sm:$0xff]
        %v740 = vld [vmem:[#allocation2 + $0x20] sm:$0xff]
        %v741 = vld [vmem:[%s206 + $0x4] sm:$0xe]
        %v742 = vld [vmem:[%s206 + $0x8] sm:$0xf]
        %v743 = vld [vmem:[%s206 + $0xc] sm:$0xf]
        %v744 = vld [vmem:[%s206 + $0x10] sm:$0xf]
        %v745 = vld [vmem:[%s206 + $0x14] sm:$0xf]
        %v746 = vld [vmem:[%s206 + $0x18] sm:$0x1]
        %s747 = scalar_lea.vmem [#allocation6], 192
        %v748 = vld [vmem:[%s747] sm:$0xf]
        %v749 = vld [vmem:[%s747 + $0x4] sm:$0xf]
        %v750 = vld [vmem:[%s747 + $0x8] sm:$0xf]
        %v751 = vld [vmem:[%s747 + $0xc] sm:$0xf]
        %v752 = vld [vmem:[%s747 + $0x10] sm:$0xf]
        %v753 = vld [vmem:[%s747 + $0x14] sm:$0xf]
        %v754 = vld [vmem:[%s747 + $0x18] sm:$0xf]
        %v755 = vld [vmem:[%s747 + $0x1c] sm:$0xf]
        %v756 = vld [vmem:[%s747 + $0x20] sm:$0xf]
        %v757 = vld [vmem:[%s747 + $0x24] sm:$0xf]
        %v758 = vld [vmem:[%s747 + $0x28] sm:$0xf]
        %v759 = vld [vmem:[%s747 + $0x2c] sm:$0xf]
        %v760 = vld [vmem:[%s747 + $0x30] sm:$0xf]
        %v761 = vld [vmem:[%s747 + $0x34] sm:$0xf]
        %v762 = vld [vmem:[%s747 + $0x38] sm:$0xf]
        %v763 = vld [vmem:[%s747 + $0x3c] sm:$0xf]
        %v770 = vunpack.c.l.b16 %v741
        %v771 = vunpack.c.l.b16 %v742
        %v772 = vunpack.c.l.b16 %v743
        %v773 = vunpack.c.l.b16 %v744
        %v774 = vunpack.c.l.b16 %v745
        %v775 = vunpack.c.l.b16 %v746
        %v776 = vpack.c.b16 %v771, %v770
        %v777 = vpack.c.b16 %v773, %v772
        %v778 = vpack.c.b16 %v775, %v774
        %v779 = vrot.slane %v776, 1
        %v780 = vrot.slane %v777, 1
        %v781 = vsel %vm613, %v779, %v780
        %v782 = vrot.slane %v778, 1
        %v783 = vsel %vm613, %v780, %v782
        %v803 = vunpack.c.l.b16 %v748
        %v804 = vunpack.c.l.b16 %v749
        %v805 = vunpack.c.l.b16 %v750
        %v806 = vunpack.c.l.b16 %v751
        %v807 = vunpack.c.l.b16 %v752
        %v808 = vunpack.c.l.b16 %v753
        %v809 = vunpack.c.l.b16 %v754
        %v810 = vunpack.c.l.b16 %v755
        %v811 = vunpack.c.l.b16 %v756
        %v812 = vunpack.c.l.b16 %v757
        %v813 = vunpack.c.l.b16 %v758
        %v814 = vunpack.c.l.b16 %v759
        %v815 = vunpack.c.l.b16 %v760
        %v816 = vunpack.c.l.b16 %v761
        %v817 = vunpack.c.l.b16 %v762
        %v818 = vunpack.c.l.b16 %v763
        %v819 = vpack.c.b16 %v804, %v803
        %v820 = vpack.c.b16 %v806, %v805
        %v821 = vpack.c.b16 %v808, %v807
        %v822 = vpack.c.b16 %v810, %v809
        %v823 = vpack.c.b16 %v812, %v811
        %v824 = vpack.c.b16 %v814, %v813
        %v825 = vpack.c.b16 %v816, %v815
        %v826 = vpack.c.b16 %v818, %v817
        %835 = vmatprep.subr.bf16.mxu0 0
        %836 = vmatpush1.bf16.msra.mxu0 %v819
        %837 = vmatprep.subr.bf16.mxu0 0
        %838 = vmatpush1.bf16.msra.mxu0 %v820
        %839 = vmatprep.subr.bf16.mxu0 0
        %840 = vmatpush1.bf16.msra.mxu0 %v821
        %841 = vmatprep.subr.bf16.mxu0 0
        %842 = vmatpush1.bf16.msra.mxu0 %v822
        %843 = vmatprep.subr.bf16.mxu0 0
        %844 = vmatpush1.bf16.msra.mxu0 %v823
        %845 = vmatprep.subr.bf16.mxu0 0
        %846 = vmatpush1.bf16.msra.mxu0 %v824
        %847 = vmatprep.subr.bf16.mxu0 0
        %848 = vmatpush1.bf16.msra.mxu0 %v825
        %849 = vmatprep.subr.bf16.mxu0 0
        %850 = vmatpush1.bf16.msra.mxu0 %v826
        %851 = vmatprep.subr.bf16.mxu0 0
        %852 = vmatpush1.bf16.msra.mxu0 0
        %853 = vmatprep.subr.bf16.mxu0 0
        %854 = vmatpush1.bf16.msra.mxu0 0
        %855 = vmatprep.subr.bf16.mxu0 0
        %856 = vmatpush1.bf16.msra.mxu0 0
        %857 = vmatprep.subr.bf16.mxu0 0
        %858 = vmatpush1.bf16.msra.mxu0 0
        %859 = vmatprep.subr.bf16.mxu0 0
        %860 = vmatpush1.bf16.msra.mxu0 0
        %861 = vmatprep.subr.bf16.mxu0 0
        %862 = vmatpush1.bf16.msra.mxu0 0
        %863 = vmatprep.subr.bf16.mxu0 0
        %864 = vmatpush1.bf16.msra.mxu0 0
        %865 = vmatprep.subr.bf16.mxu0 0
        %866 = vmatpush1.bf16.msra.mxu0 0
        %867 = vmatprep.mubr.bf16.mxu0 0
        %868 = vmatmul.mubr.bf16.gmra.mrb[0].mxu0 %v781
        %v869 = vpop.f32.mrb[0].mxu0
        %v870 = vadd.f32 0.0, %v869
        %v871 = vpop.f32.mrb[0].mxu0
        %v872 = vpop.f32.mrb[0].mxu0
        %v873 = vadd.f32 0.0, %v872
        %v874 = vpop.f32.mrb[0].mxu0
        %875 = vmatprep.mubr.bf16.mxu0 0
        %876 = vmatmul.mubr.bf16.gmra.mrb[0].mxu0 %v783
        %v877 = vpop.f32.mrb[0].mxu0
        %v878 = vadd.f32 0.0, %v877
        %v879 = vpop.f32.mrb[0].mxu0
        %v880 = vpop.f32.mrb[0].mxu0
        %v881 = vadd.f32 0.0, %v880
        %v882 = vpop.f32.mrb[0].mxu0
        %883 = vmatprep.mubr.bf16.mxu0 0
        %884 = vmatmul.mubr.bf16.gmra.mrb[0].mxu0 %v782
        %v885 = vpop.f32.mrb[0].mxu0
        %v886 = vadd.f32 0.0, %v885
        %v887 = vpop.f32.mrb[0].mxu0
        %v888 = vpop.f32.mrb[0].mxu0
        %v889 = vpop.f32.mrb[0].mxu0
        %890 = vdwg.mxu0
        %v891 = vadd.f32 %v736, %v870
        %v892 = vadd.f32 %v737, %v873
        %v893 = vadd.f32 %v738, %v878
        %v894 = vadd.f32 %v739, %v881
        %v895 = vadd.f32 %v740, %v886
        %896 = vst [vmem:[#allocation2] sm:$0xff] %v891
        %897 = vst [vmem:[#allocation2 + $0x8] sm:$0xff] %v892
        %898 = vst [vmem:[#allocation2 + $0x10] sm:$0xff] %v893
        %899 = vst [vmem:[#allocation2 + $0x18] sm:$0xff] %v894
        %900 = vst [vmem:[#allocation2 + $0x20] sm:$0xff] %v895
        %v901 = vld [vmem:[#allocation2] sm:$0xff]
        %v902 = vld [vmem:[#allocation2 + $0x8] sm:$0xff]
        %v903 = vld [vmem:[#allocation2 + $0x10] sm:$0xff]
        %v904 = vld [vmem:[#allocation2 + $0x18] sm:$0xff]
        %v905 = vld [vmem:[#allocation2 + $0x20] sm:$0xff]
        %v906 = vld [vmem:[%s206 + $0x4] sm:$0xe]
        %v907 = vld [vmem:[%s206 + $0x8] sm:$0xf]
        %v908 = vld [vmem:[%s206 + $0xc] sm:$0xf]
        %v909 = vld [vmem:[%s206 + $0x10] sm:$0xf]
        %v910 = vld [vmem:[%s206 + $0x14] sm:$0xf]
        %v911 = vld [vmem:[%s206 + $0x18] sm:$0x3]
        %s912 = scalar_lea.vmem [#allocation6], 256
        %v913 = vld [vmem:[%s912] sm:$0xf]
        %v914 = vld [vmem:[%s912 + $0x4] sm:$0xf]
        %v915 = vld [vmem:[%s912 + $0x8] sm:$0xf]
        %v916 = vld [vmem:[%s912 + $0xc] sm:$0xf]
        %v917 = vld [vmem:[%s912 + $0x10] sm:$0xf]
        %v918 = vld [vmem:[%s912 + $0x14] sm:$0xf]
        %v919 = vld [vmem:[%s912 + $0x18] sm:$0xf]
        %v920 = vld [vmem:[%s912 + $0x1c] sm:$0xf]
        %v921 = vld [vmem:[%s912 + $0x20] sm:$0xf]
        %v922 = vld [vmem:[%s912 + $0x24] sm:$0xf]
        %v923 = vld [vmem:[%s912 + $0x28] sm:$0xf]
        %v924 = vld [vmem:[%s912 + $0x2c] sm:$0xf]
        %v925 = vld [vmem:[%s912 + $0x30] sm:$0xf]
        %v926 = vld [vmem:[%s912 + $0x34] sm:$0xf]
        %v927 = vld [vmem:[%s912 + $0x38] sm:$0xf]
        %v928 = vld [vmem:[%s912 + $0x3c] sm:$0xf]
        %v935 = vunpack.c.l.b16 %v906
        %v936 = vunpack.c.l.b16 %v907
        %v937 = vunpack.c.l.b16 %v908
        %v938 = vunpack.c.l.b16 %v909
        %v939 = vunpack.c.l.b16 %v910
        %v940 = vunpack.c.l.b16 %v911
        %v941 = vpack.c.b16 %v936, %v935
        %v942 = vpack.c.b16 %v938, %v937
        %v943 = vpack.c.b16 %v940, %v939
        %vm944 = vsmask.f32 6400
        %v946 = vshrl.u32 %v941, 16
        %v948 = vrot.slane %v946, 1
        %v949 = vshll.u32 %v941, 16
        %v951 = vrot.slane %v949, 2
        %v952 = vor.u32 %v948, %v951
        %v954 = vshrl.u32 %v942, 16
        %v956 = vrot.slane %v954, 1
        %v957 = vshll.u32 %v942, 16
        %v959 = vrot.slane %v957, 2
        %v960 = vor.u32 %v956, %v959
        %v961 = vsel %vm944, %v952, %v960
        %v963 = vshrl.u32 %v943, 16
        %v965 = vrot.slane %v963, 1
        %v966 = vshll.u32 %v943, 16
        %v968 = vrot.slane %v966, 2
        %v969 = vor.u32 %v965, %v968
        %v970 = vsel %vm944, %v960, %v969
        %v990 = vunpack.c.l.b16 %v913
        %v991 = vunpack.c.l.b16 %v914
        %v992 = vunpack.c.l.b16 %v915
        %v993 = vunpack.c.l.b16 %v916
        %v994 = vunpack.c.l.b16 %v917
        %v995 = vunpack.c.l.b16 %v918
        %v996 = vunpack.c.l.b16 %v919
        %v997 = vunpack.c.l.b16 %v920
        %v998 = vunpack.c.l.b16 %v921
        %v999 = vunpack.c.l.b16 %v922
        %v1000 = vunpack.c.l.b16 %v923
        %v1001 = vunpack.c.l.b16 %v924
        %v1002 = vunpack.c.l.b16 %v925
        %v1003 = vunpack.c.l.b16 %v926
        %v1004 = vunpack.c.l.b16 %v927
        %v1005 = vunpack.c.l.b16 %v928
        %v1006 = vpack.c.b16 %v991, %v990
        %v1007 = vpack.c.b16 %v993, %v992
        %v1008 = vpack.c.b16 %v995, %v994
        %v1009 = vpack.c.b16 %v997, %v996
        %v1010 = vpack.c.b16 %v999, %v998
        %v1011 = vpack.c.b16 %v1001, %v1000
        %v1012 = vpack.c.b16 %v1003, %v1002
        %v1013 = vpack.c.b16 %v1005, %v1004
        %1022 = vmatprep.subr.bf16.mxu0 0
        %1023 = vmatpush1.bf16.msra.mxu0 %v1006
        %1024 = vmatprep.subr.bf16.mxu0 0
        %1025 = vmatpush1.bf16.msra.mxu0 %v1007
        %1026 = vmatprep.subr.bf16.mxu0 0
        %1027 = vmatpush1.bf16.msra.mxu0 %v1008
        %1028 = vmatprep.subr.bf16.mxu0 0
        %1029 = vmatpush1.bf16.msra.mxu0 %v1009
        %1030 = vmatprep.subr.bf16.mxu0 0
        %1031 = vmatpush1.bf16.msra.mxu0 %v1010
        %1032 = vmatprep.subr.bf16.mxu0 0
        %1033 = vmatpush1.bf16.msra.mxu0 %v1011
        %1034 = vmatprep.subr.bf16.mxu0 0
        %1035 = vmatpush1.bf16.msra.mxu0 %v1012
        %1036 = vmatprep.subr.bf16.mxu0 0
        %1037 = vmatpush1.bf16.msra.mxu0 %v1013
        %1038 = vmatprep.subr.bf16.mxu0 0
        %1039 = vmatpush1.bf16.msra.mxu0 0
        %1040 = vmatprep.subr.bf16.mxu0 0
        %1041 = vmatpush1.bf16.msra.mxu0 0
        %1042 = vmatprep.subr.bf16.mxu0 0
        %1043 = vmatpush1.bf16.msra.mxu0 0
        %1044 = vmatprep.subr.bf16.mxu0 0
        %1045 = vmatpush1.bf16.msra.mxu0 0
        %1046 = vmatprep.subr.bf16.mxu0 0
        %1047 = vmatpush1.bf16.msra.mxu0 0
        %1048 = vmatprep.subr.bf16.mxu0 0
        %1049 = vmatpush1.bf16.msra.mxu0 0
        %1050 = vmatprep.subr.bf16.mxu0 0
        %1051 = vmatpush1.bf16.msra.mxu0 0
        %1052 = vmatprep.subr.bf16.mxu0 0
        %1053 = vmatpush1.bf16.msra.mxu0 0
        %1054 = vmatprep.mubr.bf16.mxu0 0
        %1055 = vmatmul.mubr.bf16.gmra.mrb[0].mxu0 %v961
        %v1056 = vpop.f32.mrb[0].mxu0
        %v1057 = vadd.f32 0.0, %v1056
        %v1058 = vpop.f32.mrb[0].mxu0
        %v1059 = vpop.f32.mrb[0].mxu0
        %v1060 = vadd.f32 0.0, %v1059
        %v1061 = vpop.f32.mrb[0].mxu0
        %1062 = vmatprep.mubr.bf16.mxu0 0
        %1063 = vmatmul.mubr.bf16.gmra.mrb[0].mxu0 %v970
        %v1064 = vpop.f32.mrb[0].mxu0
        %v1065 = vadd.f32 0.0, %v1064
        %v1066 = vpop.f32.mrb[0].mxu0
        %v1067 = vpop.f32.mrb[0].mxu0
        %v1068 = vadd.f32 0.0, %v1067
        %v1069 = vpop.f32.mrb[0].mxu0
        %1070 = vmatprep.mubr.bf16.mxu0 0
        %1071 = vmatmul.mubr.bf16.gmra.mrb[0].mxu0 %v969
        %v1072 = vpop.f32.mrb[0].mxu0
        %v1073 = vadd.f32 0.0, %v1072
        %v1074 = vpop.f32.mrb[0].mxu0
        %v1075 = vpop.f32.mrb[0].mxu0
        %v1076 = vpop.f32.mrb[0].mxu0
        %1077 = vdwg.mxu0
        %v1078 = vadd.f32 %v901, %v1057
        %v1079 = vadd.f32 %v902, %v1060
        %v1080 = vadd.f32 %v903, %v1065
        %v1081 = vadd.f32 %v904, %v1068
        %v1082 = vadd.f32 %v905, %v1073
        %1083 = vst [vmem:[#allocation2] sm:$0xff] %v1078
        %1084 = vst [vmem:[#allocation2 + $0x8] sm:$0xff] %v1079
        %1085 = vst [vmem:[#allocation2 + $0x10] sm:$0xff] %v1080
        %1086 = vst [vmem:[#allocation2 + $0x18] sm:$0xff] %v1081
        %1087 = vst [vmem:[#allocation2 + $0x20] sm:$0xff] %v1082
        %v1088 = vld [vmem:[#allocation2] sm:$0xff]
        %v1089 = vld [vmem:[#allocation2 + $0x8] sm:$0xff]
        %v1090 = vld [vmem:[#allocation2 + $0x10] sm:$0xff]
        %v1091 = vld [vmem:[#allocation2 + $0x18] sm:$0xff]
        %v1092 = vld [vmem:[#allocation2 + $0x20] sm:$0xff]
        %v1093 = vld [vmem:[%s206 + $0x4] sm:$0xc]
        %v1094 = vld [vmem:[%s206 + $0x8] sm:$0xf]
        %v1095 = vld [vmem:[%s206 + $0xc] sm:$0xf]
        %v1096 = vld [vmem:[%s206 + $0x10] sm:$0xf]
        %v1097 = vld [vmem:[%s206 + $0x14] sm:$0xf]
        %v1098 = vld [vmem:[%s206 + $0x18] sm:$0x3]
        %s1099 = scalar_lea.vmem [#allocation6], 320
        %v1100 = vld [vmem:[%s1099] sm:$0xf]
        %v1101 = vld [vmem:[%s1099 + $0x4] sm:$0xf]
        %v1102 = vld [vmem:[%s1099 + $0x8] sm:$0xf]
        %v1103 = vld [vmem:[%s1099 + $0xc] sm:$0xf]
        %v1104 = vld [vmem:[%s1099 + $0x10] sm:$0xf]
        %v1105 = vld [vmem:[%s1099 + $0x14] sm:$0xf]
        %v1106 = vld [vmem:[%s1099 + $0x18] sm:$0xf]
        %v1107 = vld [vmem:[%s1099 + $0x1c] sm:$0xf]
        %v1108 = vld [vmem:[%s1099 + $0x20] sm:$0xf]
        %v1109 = vld [vmem:[%s1099 + $0x24] sm:$0xf]
        %v1110 = vld [vmem:[%s1099 + $0x28] sm:$0xf]
        %v1111 = vld [vmem:[%s1099 + $0x2c] sm:$0xf]
        %v1112 = vld [vmem:[%s1099 + $0x30] sm:$0xf]
        %v1113 = vld [vmem:[%s1099 + $0x34] sm:$0xf]
        %v1114 = vld [vmem:[%s1099 + $0x38] sm:$0xf]
        %v1115 = vld [vmem:[%s1099 + $0x3c] sm:$0xf]
        %v1122 = vunpack.c.l.b16 %v1093
        %v1123 = vunpack.c.l.b16 %v1094
        %v1124 = vunpack.c.l.b16 %v1095
        %v1125 = vunpack.c.l.b16 %v1096
        %v1126 = vunpack.c.l.b16 %v1097
        %v1127 = vunpack.c.l.b16 %v1098
        %v1128 = vpack.c.b16 %v1123, %v1122
        %v1129 = vpack.c.b16 %v1125, %v1124
        %v1130 = vpack.c.b16 %v1127, %v1126
        %vm1131 = vcmask 1045504
        %v1132 = vrot.slane %v1128, 2
        %v1133 = vrot.slane %v1129, 2
        %v1134 = vsel %vm1131, %v1132, %v1133
        %v1135 = vrot.slane %v1130, 2
        %v1136 = vsel %vm1131, %v1133, %v1135
        %v1156 = vunpack.c.l.b16 %v1100
        %v1157 = vunpack.c.l.b16 %v1101
        %v1158 = vunpack.c.l.b16 %v1102
        %v1159 = vunpack.c.l.b16 %v1103
        %v1160 = vunpack.c.l.b16 %v1104
        %v1161 = vunpack.c.l.b16 %v1105
        %v1162 = vunpack.c.l.b16 %v1106
        %v1163 = vunpack.c.l.b16 %v1107
        %v1164 = vunpack.c.l.b16 %v1108
        %v1165 = vunpack.c.l.b16 %v1109
        %v1166 = vunpack.c.l.b16 %v1110
        %v1167 = vunpack.c.l.b16 %v1111
        %v1168 = vunpack.c.l.b16 %v1112
        %v1169 = vunpack.c.l.b16 %v1113
        %v1170 = vunpack.c.l.b16 %v1114
        %v1171 = vunpack.c.l.b16 %v1115
        %v1172 = vpack.c.b16 %v1157, %v1156
        %v1173 = vpack.c.b16 %v1159, %v1158
        %v1174 = vpack.c.b16 %v1161, %v1160
        %v1175 = vpack.c.b16 %v1163, %v1162
        %v1176 = vpack.c.b16 %v1165, %v1164
        %v1177 = vpack.c.b16 %v1167, %v1166
        %v1178 = vpack.c.b16 %v1169, %v1168
        %v1179 = vpack.c.b16 %v1171, %v1170
        %1188 = vmatprep.subr.bf16.mxu0 0
        %1189 = vmatpush1.bf16.msra.mxu0 %v1172
        %1190 = vmatprep.subr.bf16.mxu0 0
        %1191 = vmatpush1.bf16.msra.mxu0 %v1173
        %1192 = vmatprep.subr.bf16.mxu0 0
        %1193 = vmatpush1.bf16.msra.mxu0 %v1174
        %1194 = vmatprep.subr.bf16.mxu0 0
        %1195 = vmatpush1.bf16.msra.mxu0 %v1175
        %1196 = vmatprep.subr.bf16.mxu0 0
        %1197 = vmatpush1.bf16.msra.mxu0 %v1176
        %1198 = vmatprep.subr.bf16.mxu0 0
        %1199 = vmatpush1.bf16.msra.mxu0 %v1177
        %1200 = vmatprep.subr.bf16.mxu0 0
        %1201 = vmatpush1.bf16.msra.mxu0 %v1178
        %1202 = vmatprep.subr.bf16.mxu0 0
        %1203 = vmatpush1.bf16.msra.mxu0 %v1179
        %1204 = vmatprep.subr.bf16.mxu0 0
        %1205 = vmatpush1.bf16.msra.mxu0 0
        %1206 = vmatprep.subr.bf16.mxu0 0
        %1207 = vmatpush1.bf16.msra.mxu0 0
        %1208 = vmatprep.subr.bf16.mxu0 0
        %1209 = vmatpush1.bf16.msra.mxu0 0
        %1210 = vmatprep.subr.bf16.mxu0 0
        %1211 = vmatpush1.bf16.msra.mxu0 0
        %1212 = vmatprep.subr.bf16.mxu0 0
        %1213 = vmatpush1.bf16.msra.mxu0 0
        %1214 = vmatprep.subr.bf16.mxu0 0
        %1215 = vmatpush1.bf16.msra.mxu0 0
        %1216 = vmatprep.subr.bf16.mxu0 0
        %1217 = vmatpush1.bf16.msra.mxu0 0
        %1218 = vmatprep.subr.bf16.mxu0 0
        %1219 = vmatpush1.bf16.msra.mxu0 0
        %1220 = vmatprep.mubr.bf16.mxu0 0
        %1221 = vmatmul.mubr.bf16.gmra.mrb[0].mxu0 %v1134
        %v1222 = vpop.f32.mrb[0].mxu0
        %v1223 = vadd.f32 0.0, %v1222
        %v1224 = vpop.f32.mrb[0].mxu0
        %v1225 = vpop.f32.mrb[0].mxu0
        %v1226 = vadd.f32 0.0, %v1225
        %v1227 = vpop.f32.mrb[0].mxu0
        %1228 = vmatprep.mubr.bf16.mxu0 0
        %1229 = vmatmul.mubr.bf16.gmra.mrb[0].mxu0 %v1136
        %v1230 = vpop.f32.mrb[0].mxu0
        %v1231 = vadd.f32 0.0, %v1230
        %v1232 = vpop.f32.mrb[0].mxu0
        %v1233 = vpop.f32.mrb[0].mxu0
        %v1234 = vadd.f32 0.0, %v1233
        %v1235 = vpop.f32.mrb[0].mxu0
        %1236 = vmatprep.mubr.bf16.mxu0 0
        %1237 = vmatmul.mubr.bf16.gmra.mrb[0].mxu0 %v1135
        %v1238 = vpop.f32.mrb[0].mxu0
        %v1239 = vadd.f32 0.0, %v1238
        %v1240 = vpop.f32.mrb[0].mxu0
        %v1241 = vpop.f32.mrb[0].mxu0
        %v1242 = vpop.f32.mrb[0].mxu0
        %1243 = vdwg.mxu0
        %v1244 = vadd.f32 %v1088, %v1223
        %v1245 = vadd.f32 %v1089, %v1226
        %v1246 = vadd.f32 %v1090, %v1231
        %v1247 = vadd.f32 %v1091, %v1234
        %v1248 = vadd.f32 %v1092, %v1239
        %1249 = vst [vmem:[#allocation2] sm:$0xff] %v1244
        %1250 = vst [vmem:[#allocation2 + $0x8] sm:$0xff] %v1245
        %1251 = vst [vmem:[#allocation2 + $0x10] sm:$0xff] %v1246
        %1252 = vst [vmem:[#allocation2 + $0x18] sm:$0xff] %v1247
        %1253 = vst [vmem:[#allocation2 + $0x20] sm:$0xff] %v1248
        %v1254 = vld [vmem:[#allocation2] sm:$0xff]
        %v1255 = vld [vmem:[#allocation2 + $0x8] sm:$0xff]
        %v1256 = vld [vmem:[#allocation2 + $0x10] sm:$0xff]
        %v1257 = vld [vmem:[#allocation2 + $0x18] sm:$0xff]
        %v1258 = vld [vmem:[#allocation2 + $0x20] sm:$0xff]
        %v1259 = vld [vmem:[%s206 + $0x8] sm:$0xc]
        %v1260 = vld [vmem:[%s206 + $0xc] sm:$0xf]
        %v1261 = vld [vmem:[%s206 + $0x10] sm:$0xf]
        %v1262 = vld [vmem:[%s206 + $0x14] sm:$0xf]
        %v1263 = vld [vmem:[%s206 + $0x18] sm:$0xf]
        %v1264 = vld [vmem:[%s206 + $0x1c] sm:$0x3]
        %s1265 = scalar_lea.vmem [#allocation6], 384
        %v1266 = vld [vmem:[%s1265] sm:$0xf]
        %v1267 = vld [vmem:[%s1265 + $0x4] sm:$0xf]
        %v1268 = vld [vmem:[%s1265 + $0x8] sm:$0xf]
        %v1269 = vld [vmem:[%s1265 + $0xc] sm:$0xf]
        %v1270 = vld [vmem:[%s1265 + $0x10] sm:$0xf]
        %v1271 = vld [vmem:[%s1265 + $0x14] sm:$0xf]
        %v1272 = vld [vmem:[%s1265 + $0x18] sm:$0xf]
        %v1273 = vld [vmem:[%s1265 + $0x1c] sm:$0xf]
        %v1274 = vld [vmem:[%s1265 + $0x20] sm:$0xf]
        %v1275 = vld [vmem:[%s1265 + $0x24] sm:$0xf]
        %v1276 = vld [vmem:[%s1265 + $0x28] sm:$0xf]
        %v1277 = vld [vmem:[%s1265 + $0x2c] sm:$0xf]
        %v1278 = vld [vmem:[%s1265 + $0x30] sm:$0xf]
        %v1279 = vld [vmem:[%s1265 + $0x34] sm:$0xf]
        %v1280 = vld [vmem:[%s1265 + $0x38] sm:$0xf]
        %v1281 = vld [vmem:[%s1265 + $0x3c] sm:$0xf]
        %v1288 = vunpack.c.l.b16 %v1259
        %v1289 = vunpack.c.l.b16 %v1260
        %v1290 = vunpack.c.l.b16 %v1261
        %v1291 = vunpack.c.l.b16 %v1262
        %v1292 = vunpack.c.l.b16 %v1263
        %v1293 = vunpack.c.l.b16 %v1264
        %v1294 = vpack.c.b16 %v1289, %v1288
        %v1295 = vpack.c.b16 %v1291, %v1290
        %v1296 = vpack.c.b16 %v1293, %v1292
        %v1297 = vrot.slane %v1294, 2
        %v1298 = vrot.slane %v1295, 2
        %v1299 = vsel %vm1131, %v1297, %v1298
        %v1300 = vrot.slane %v1296, 2
        %v1301 = vsel %vm1131, %v1298, %v1300
        %v1321 = vunpack.c.l.b16 %v1266
        %v1322 = vunpack.c.l.b16 %v1267
        %v1323 = vunpack.c.l.b16 %v1268
        %v1324 = vunpack.c.l.b16 %v1269
        %v1325 = vunpack.c.l.b16 %v1270
        %v1326 = vunpack.c.l.b16 %v1271
        %v1327 = vunpack.c.l.b16 %v1272
        %v1328 = vunpack.c.l.b16 %v1273
        %v1329 = vunpack.c.l.b16 %v1274
        %v1330 = vunpack.c.l.b16 %v1275
        %v1331 = vunpack.c.l.b16 %v1276
        %v1332 = vunpack.c.l.b16 %v1277
        %v1333 = vunpack.c.l.b16 %v1278
        %v1334 = vunpack.c.l.b16 %v1279
        %v1335 = vunpack.c.l.b16 %v1280
        %v1336 = vunpack.c.l.b16 %v1281
        %v1337 = vpack.c.b16 %v1322, %v1321
        %v1338 = vpack.c.b16 %v1324, %v1323
        %v1339 = vpack.c.b16 %v1326, %v1325
        %v1340 = vpack.c.b16 %v1328, %v1327
        %v1341 = vpack.c.b16 %v1330, %v1329
        %v1342 = vpack.c.b16 %v1332, %v1331
        %v1343 = vpack.c.b16 %v1334, %v1333
        %v1344 = vpack.c.b16 %v1336, %v1335
        %1353 = vmatprep.subr.bf16.mxu0 0
        %1354 = vmatpush1.bf16.msra.mxu0 %v1337
        %1355 = vmatprep.subr.bf16.mxu0 0
        %1356 = vmatpush1.bf16.msra.mxu0 %v1338
        %1357 = vmatprep.subr.bf16.mxu0 0
        %1358 = vmatpush1.bf16.msra.mxu0 %v1339
        %1359 = vmatprep.subr.bf16.mxu0 0
        %1360 = vmatpush1.bf16.msra.mxu0 %v1340
        %1361 = vmatprep.subr.bf16.mxu0 0
        %1362 = vmatpush1.bf16.msra.mxu0 %v1341
        %1363 = vmatprep.subr.bf16.mxu0 0
        %1364 = vmatpush1.bf16.msra.mxu0 %v1342
        %1365 = vmatprep.subr.bf16.mxu0 0
        %1366 = vmatpush1.bf16.msra.mxu0 %v1343
        %1367 = vmatprep.subr.bf16.mxu0 0
        %1368 = vmatpush1.bf16.msra.mxu0 %v1344
        %1369 = vmatprep.subr.bf16.mxu0 0
        %1370 = vmatpush1.bf16.msra.mxu0 0
        %1371 = vmatprep.subr.bf16.mxu0 0
        %1372 = vmatpush1.bf16.msra.mxu0 0
        %1373 = vmatprep.subr.bf16.mxu0 0
        %1374 = vmatpush1.bf16.msra.mxu0 0
        %1375 = vmatprep.subr.bf16.mxu0 0
        %1376 = vmatpush1.bf16.msra.mxu0 0
        %1377 = vmatprep.subr.bf16.mxu0 0
        %1378 = vmatpush1.bf16.msra.mxu0 0
        %1379 = vmatprep.subr.bf16.mxu0 0
        %1380 = vmatpush1.bf16.msra.mxu0 0
        %1381 = vmatprep.subr.bf16.mxu0 0
        %1382 = vmatpush1.bf16.msra.mxu0 0
        %1383 = vmatprep.subr.bf16.mxu0 0
        %1384 = vmatpush1.bf16.msra.mxu0 0
        %1385 = vmatprep.mubr.bf16.mxu0 0
        %1386 = vmatmul.mubr.bf16.gmra.mrb[0].mxu0 %v1299
        %v1387 = vpop.f32.mrb[0].mxu0
        %v1388 = vadd.f32 0.0, %v1387
        %v1389 = vpop.f32.mrb[0].mxu0
        %v1390 = vpop.f32.mrb[0].mxu0
        %v1391 = vadd.f32 0.0, %v1390
        %v1392 = vpop.f32.mrb[0].mxu0
        %1393 = vmatprep.mubr.bf16.mxu0 0
        %1394 = vmatmul.mubr.bf16.gmra.mrb[0].mxu0 %v1301
        %v1395 = vpop.f32.mrb[0].mxu0
        %v1396 = vadd.f32 0.0, %v1395
        %v1397 = vpop.f32.mrb[0].mxu0
        %v1398 = vpop.f32.mrb[0].mxu0
        %v1399 = vadd.f32 0.0, %v1398
        %v1400 = vpop.f32.mrb[0].mxu0
        %1401 = vmatprep.mubr.bf16.mxu0 0
        %1402 = vmatmul.mubr.bf16.gmra.mrb[0].mxu0 %v1300
        %v1403 = vpop.f32.mrb[0].mxu0
        %v1404 = vadd.f32 0.0, %v1403
        %v1405 = vpop.f32.mrb[0].mxu0
        %v1406 = vpop.f32.mrb[0].mxu0
        %v1407 = vpop.f32.mrb[0].mxu0
        %1408 = vdwg.mxu0
        %v1409 = vadd.f32 %v1254, %v1388
        %v1410 = vadd.f32 %v1255, %v1391
        %v1411 = vadd.f32 %v1256, %v1396
        %v1412 = vadd.f32 %v1257, %v1399
        %v1413 = vadd.f32 %v1258, %v1404
        %1414 = vst [vmem:[#allocation2] sm:$0xff] %v1409
        %1415 = vst [vmem:[#allocation2 + $0x8] sm:$0xff] %v1410
        %1416 = vst [vmem:[#allocation2 + $0x10] sm:$0xff] %v1411
        %1417 = vst [vmem:[#allocation2 + $0x18] sm:$0xff] %v1412
        %1418 = vst [vmem:[#allocation2 + $0x20] sm:$0xff] %v1413
        %v1419 = vld [vmem:[#allocation2] sm:$0xff]
        %v1420 = vld [vmem:[#allocation2 + $0x8] sm:$0xff]
        %v1421 = vld [vmem:[#allocation2 + $0x10] sm:$0xff]
        %v1422 = vld [vmem:[#allocation2 + $0x18] sm:$0xff]
        %v1423 = vld [vmem:[#allocation2 + $0x20] sm:$0xff]
        %v1424 = vld [vmem:[%s206 + $0x8] sm:$0xc]
        %v1425 = vld [vmem:[%s206 + $0xc] sm:$0xf]
        %v1426 = vld [vmem:[%s206 + $0x10] sm:$0xf]
        %v1427 = vld [vmem:[%s206 + $0x14] sm:$0xf]
        %v1428 = vld [vmem:[%s206 + $0x18] sm:$0xf]
        %v1429 = vld [vmem:[%s206 + $0x1c] sm:$0x7]
        %s1430 = scalar_lea.vmem [#allocation6], 448
        %v1431 = vld [vmem:[%s1430] sm:$0xf]
        %v1432 = vld [vmem:[%s1430 + $0x4] sm:$0xf]
        %v1433 = vld [vmem:[%s1430 + $0x8] sm:$0xf]
        %v1434 = vld [vmem:[%s1430 + $0xc] sm:$0xf]
        %v1435 = vld [vmem:[%s1430 + $0x10] sm:$0xf]
        %v1436 = vld [vmem:[%s1430 + $0x14] sm:$0xf]
        %v1437 = vld [vmem:[%s1430 + $0x18] sm:$0xf]
        %v1438 = vld [vmem:[%s1430 + $0x1c] sm:$0xf]
        %v1439 = vld [vmem:[%s1430 + $0x20] sm:$0xf]
        %v1440 = vld [vmem:[%s1430 + $0x24] sm:$0xf]
        %v1441 = vld [vmem:[%s1430 + $0x28] sm:$0xf]
        %v1442 = vld [vmem:[%s1430 + $0x2c] sm:$0xf]
        %v1443 = vld [vmem:[%s1430 + $0x30] sm:$0xf]
        %v1444 = vld [vmem:[%s1430 + $0x34] sm:$0xf]
        %v1445 = vld [vmem:[%s1430 + $0x38] sm:$0xf]
        %v1446 = vld [vmem:[%s1430 + $0x3c] sm:$0xf]
        %v1453 = vunpack.c.l.b16 %v1424
        %v1454 = vunpack.c.l.b16 %v1425
        %v1455 = vunpack.c.l.b16 %v1426
        %v1456 = vunpack.c.l.b16 %v1427
        %v1457 = vunpack.c.l.b16 %v1428
        %v1458 = vunpack.c.l.b16 %v1429
        %v1459 = vpack.c.b16 %v1454, %v1453
        %v1460 = vpack.c.b16 %v1456, %v1455
        %v1461 = vpack.c.b16 %v1458, %v1457
        %vm1462 = vsmask.f32 5376
        %v1464 = vshrl.u32 %v1459, 16
        %v1466 = vrot.slane %v1464, 2
        %v1467 = vshll.u32 %v1459, 16
        %v1469 = vrot.slane %v1467, 3
        %v1470 = vor.u32 %v1466, %v1469
        %v1472 = vshrl.u32 %v1460, 16
        %v1474 = vrot.slane %v1472, 2
        %v1475 = vshll.u32 %v1460, 16
        %v1477 = vrot.slane %v1475, 3
        %v1478 = vor.u32 %v1474, %v1477
        %v1479 = vsel %vm1462, %v1470, %v1478
        %v1481 = vshrl.u32 %v1461, 16
        %v1483 = vrot.slane %v1481, 2
        %v1484 = vshll.u32 %v1461, 16
        %v1486 = vrot.slane %v1484, 3
        %v1487 = vor.u32 %v1483, %v1486
        %v1488 = vsel %vm1462, %v1478, %v1487
        %v1508 = vunpack.c.l.b16 %v1431
        %v1509 = vunpack.c.l.b16 %v1432
        %v1510 = vunpack.c.l.b16 %v1433
        %v1511 = vunpack.c.l.b16 %v1434
        %v1512 = vunpack.c.l.b16 %v1435
        %v1513 = vunpack.c.l.b16 %v1436
        %v1514 = vunpack.c.l.b16 %v1437
        %v1515 = vunpack.c.l.b16 %v1438
        %v1516 = vunpack.c.l.b16 %v1439
        %v1517 = vunpack.c.l.b16 %v1440
        %v1518 = vunpack.c.l.b16 %v1441
        %v1519 = vunpack.c.l.b16 %v1442
        %v1520 = vunpack.c.l.b16 %v1443
        %v1521 = vunpack.c.l.b16 %v1444
        %v1522 = vunpack.c.l.b16 %v1445
        %v1523 = vunpack.c.l.b16 %v1446
        %v1524 = vpack.c.b16 %v1509, %v1508
        %v1525 = vpack.c.b16 %v1511, %v1510
        %v1526 = vpack.c.b16 %v1513, %v1512
        %v1527 = vpack.c.b16 %v1515, %v1514
        %v1528 = vpack.c.b16 %v1517, %v1516
        %v1529 = vpack.c.b16 %v1519, %v1518
        %v1530 = vpack.c.b16 %v1521, %v1520
        %v1531 = vpack.c.b16 %v1523, %v1522
        %1540 = vmatprep.subr.bf16.mxu0 0
        %1541 = vmatpush1.bf16.msra.mxu0 %v1524
        %1542 = vmatprep.subr.bf16.mxu0 0
        %1543 = vmatpush1.bf16.msra.mxu0 %v1525
        %1544 = vmatprep.subr.bf16.mxu0 0
        %1545 = vmatpush1.bf16.msra.mxu0 %v1526
        %1546 = vmatprep.subr.bf16.mxu0 0
        %1547 = vmatpush1.bf16.msra.mxu0 %v1527
        %1548 = vmatprep.subr.bf16.mxu0 0
        %1549 = vmatpush1.bf16.msra.mxu0 %v1528
        %1550 = vmatprep.subr.bf16.mxu0 0
        %1551 = vmatpush1.bf16.msra.mxu0 %v1529
        %1552 = vmatprep.subr.bf16.mxu0 0
        %1553 = vmatpush1.bf16.msra.mxu0 %v1530
        %1554 = vmatprep.subr.bf16.mxu0 0
        %1555 = vmatpush1.bf16.msra.mxu0 %v1531
        %1556 = vmatprep.subr.bf16.mxu0 0
        %1557 = vmatpush1.bf16.msra.mxu0 0
        %1558 = vmatprep.subr.bf16.mxu0 0
        %1559 = vmatpush1.bf16.msra.mxu0 0
        %1560 = vmatprep.subr.bf16.mxu0 0
        %1561 = vmatpush1.bf16.msra.mxu0 0
        %1562 = vmatprep.subr.bf16.mxu0 0
        %1563 = vmatpush1.bf16.msra.mxu0 0
        %1564 = vmatprep.subr.bf16.mxu0 0
        %1565 = vmatpush1.bf16.msra.mxu0 0
        %1566 = vmatprep.subr.bf16.mxu0 0
        %1567 = vmatpush1.bf16.msra.mxu0 0
        %1568 = vmatprep.subr.bf16.mxu0 0
        %1569 = vmatpush1.bf16.msra.mxu0 0
        %1570 = vmatprep.subr.bf16.mxu0 0
        %1571 = vmatpush1.bf16.msra.mxu0 0
        %1572 = vmatprep.mubr.bf16.mxu0 0
        %1573 = vmatmul.mubr.bf16.gmra.mrb[0].mxu0 %v1479
        %v1574 = vpop.f32.mrb[0].mxu0
        %v1575 = vadd.f32 0.0, %v1574
        %v1576 = vpop.f32.mrb[0].mxu0
        %v1577 = vpop.f32.mrb[0].mxu0
        %v1578 = vadd.f32 0.0, %v1577
        %v1579 = vpop.f32.mrb[0].mxu0
        %1580 = vmatprep.mubr.bf16.mxu0 0
        %1581 = vmatmul.mubr.bf16.gmra.mrb[0].mxu0 %v1488
        %v1582 = vpop.f32.mrb[0].mxu0
        %v1583 = vadd.f32 0.0, %v1582
        %v1584 = vpop.f32.mrb[0].mxu0
        %v1585 = vpop.f32.mrb[0].mxu0
        %v1586 = vadd.f32 0.0, %v1585
        %v1587 = vpop.f32.mrb[0].mxu0
        %1588 = vmatprep.mubr.bf16.mxu0 0
        %1589 = vmatmul.mubr.bf16.gmra.mrb[0].mxu0 %v1487
        %v1590 = vpop.f32.mrb[0].mxu0
        %v1591 = vadd.f32 0.0, %v1590
        %v1592 = vpop.f32.mrb[0].mxu0
        %v1593 = vpop.f32.mrb[0].mxu0
        %v1594 = vpop.f32.mrb[0].mxu0
        %1595 = vdwg.mxu0
        %v1596 = vadd.f32 %v1419, %v1575
        %v1597 = vadd.f32 %v1420, %v1578
        %v1598 = vadd.f32 %v1421, %v1583
        %v1599 = vadd.f32 %v1422, %v1586
        %v1600 = vadd.f32 %v1423, %v1591
        %1601 = vst [vmem:[#allocation2] sm:$0xff] %v1596
        %1602 = vst [vmem:[#allocation2 + $0x8] sm:$0xff] %v1597
        %1603 = vst [vmem:[#allocation2 + $0x10] sm:$0xff] %v1598
        %1604 = vst [vmem:[#allocation2 + $0x18] sm:$0xff] %v1599
        %1605 = vst [vmem:[#allocation2 + $0x20] sm:$0xff] %v1600
        %v1606 = vld [vmem:[#allocation2] sm:$0xff]
        %v1607 = vld [vmem:[#allocation2 + $0x8] sm:$0xff]
        %v1608 = vld [vmem:[#allocation2 + $0x10] sm:$0xff]
        %v1609 = vld [vmem:[#allocation2 + $0x18] sm:$0xff]
        %v1610 = vld [vmem:[#allocation2 + $0x20] sm:$0xff]
        %v1611 = vld [vmem:[%s206 + $0x8] sm:$0x8]
        %v1612 = vld [vmem:[%s206 + $0xc] sm:$0xf]
        %v1613 = vld [vmem:[%s206 + $0x10] sm:$0xf]
        %v1614 = vld [vmem:[%s206 + $0x14] sm:$0xf]
        %v1615 = vld [vmem:[%s206 + $0x18] sm:$0xf]
        %v1616 = vld [vmem:[%s206 + $0x1c] sm:$0x7]
        %s1617 = scalar_lea.vmem [#allocation6], 512
        %v1618 = vld [vmem:[%s1617] sm:$0xf]
        %v1619 = vld [vmem:[%s1617 + $0x4] sm:$0xf]
        %v1620 = vld [vmem:[%s1617 + $0x8] sm:$0xf]
        %v1621 = vld [vmem:[%s1617 + $0xc] sm:$0xf]
        %v1622 = vld [vmem:[%s1617 + $0x10] sm:$0xf]
        %v1623 = vld [vmem:[%s1617 + $0x14] sm:$0xf]
        %v1624 = vld [vmem:[%s1617 + $0x18] sm:$0xf]
        %v1625 = vld [vmem:[%s1617 + $0x1c] sm:$0xf]
        %v1626 = vld [vmem:[%s1617 + $0x20] sm:$0xf]
        %v1627 = vld [vmem:[%s1617 + $0x24] sm:$0xf]
        %v1628 = vld [vmem:[%s1617 + $0x28] sm:$0xf]
        %v1629 = vld [vmem:[%s1617 + $0x2c] sm:$0xf]
        %v1630 = vld [vmem:[%s1617 + $0x30] sm:$0xf]
        %v1631 = vld [vmem:[%s1617 + $0x34] sm:$0xf]
        %v1632 = vld [vmem:[%s1617 + $0x38] sm:$0xf]
        %v1633 = vld [vmem:[%s1617 + $0x3c] sm:$0xf]
        %v1640 = vunpack.c.l.b16 %v1611
        %v1641 = vunpack.c.l.b16 %v1612
        %v1642 = vunpack.c.l.b16 %v1613
        %v1643 = vunpack.c.l.b16 %v1614
        %v1644 = vunpack.c.l.b16 %v1615
        %v1645 = vunpack.c.l.b16 %v1616
        %v1646 = vpack.c.b16 %v1641, %v1640
        %v1647 = vpack.c.b16 %v1643, %v1642
        %v1648 = vpack.c.b16 %v1645, %v1644
        %vm1649 = vcmask 1044480
        %v1650 = vrot.slane %v1646, 3
        %v1651 = vrot.slane %v1647, 3
        %v1652 = vsel %vm1649, %v1650, %v1651
        %v1653 = vrot.slane %v1648, 3
        %v1654 = vsel %vm1649, %v1651, %v1653
        %v1674 = vunpack.c.l.b16 %v1618
        %v1675 = vunpack.c.l.b16 %v1619
        %v1676 = vunpack.c.l.b16 %v1620
        %v1677 = vunpack.c.l.b16 %v1621
        %v1678 = vunpack.c.l.b16 %v1622
        %v1679 = vunpack.c.l.b16 %v1623
        %v1680 = vunpack.c.l.b16 %v1624
        %v1681 = vunpack.c.l.b16 %v1625
        %v1682 = vunpack.c.l.b16 %v1626
        %v1683 = vunpack.c.l.b16 %v1627
        %v1684 = vunpack.c.l.b16 %v1628
        %v1685 = vunpack.c.l.b16 %v1629
        %v1686 = vunpack.c.l.b16 %v1630
        %v1687 = vunpack.c.l.b16 %v1631
        %v1688 = vunpack.c.l.b16 %v1632
        %v1689 = vunpack.c.l.b16 %v1633
        %v1690 = vpack.c.b16 %v1675, %v1674
        %v1691 = vpack.c.b16 %v1677, %v1676
        %v1692 = vpack.c.b16 %v1679, %v1678
        %v1693 = vpack.c.b16 %v1681, %v1680
        %v1694 = vpack.c.b16 %v1683, %v1682
        %v1695 = vpack.c.b16 %v1685, %v1684
        %v1696 = vpack.c.b16 %v1687, %v1686
        %v1697 = vpack.c.b16 %v1689, %v1688
        %1706 = vmatprep.subr.bf16.mxu0 0
        %1707 = vmatpush1.bf16.msra.mxu0 %v1690
        %1708 = vmatprep.subr.bf16.mxu0 0
        %1709 = vmatpush1.bf16.msra.mxu0 %v1691
        %1710 = vmatprep.subr.bf16.mxu0 0
        %1711 = vmatpush1.bf16.msra.mxu0 %v1692
        %1712 = vmatprep.subr.bf16.mxu0 0
        %1713 = vmatpush1.bf16.msra.mxu0 %v1693
        %1714 = vmatprep.subr.bf16.mxu0 0
        %1715 = vmatpush1.bf16.msra.mxu0 %v1694
        %1716 = vmatprep.subr.bf16.mxu0 0
        %1717 = vmatpush1.bf16.msra.mxu0 %v1695
        %1718 = vmatprep.subr.bf16.mxu0 0
        %1719 = vmatpush1.bf16.msra.mxu0 %v1696
        %1720 = vmatprep.subr.bf16.mxu0 0
        %1721 = vmatpush1.bf16.msra.mxu0 %v1697
        %1722 = vmatprep.subr.bf16.mxu0 0
        %1723 = vmatpush1.bf16.msra.mxu0 0
        %1724 = vmatprep.subr.bf16.mxu0 0
        %1725 = vmatpush1.bf16.msra.mxu0 0
        %1726 = vmatprep.subr.bf16.mxu0 0
        %1727 = vmatpush1.bf16.msra.mxu0 0
        %1728 = vmatprep.subr.bf16.mxu0 0
        %1729 = vmatpush1.bf16.msra.mxu0 0
        %1730 = vmatprep.subr.bf16.mxu0 0
        %1731 = vmatpush1.bf16.msra.mxu0 0
        %1732 = vmatprep.subr.bf16.mxu0 0
        %1733 = vmatpush1.bf16.msra.mxu0 0
        %1734 = vmatprep.subr.bf16.mxu0 0
        %1735 = vmatpush1.bf16.msra.mxu0 0
        %1736 = vmatprep.subr.bf16.mxu0 0
        %1737 = vmatpush1.bf16.msra.mxu0 0
        %1738 = vmatprep.mubr.bf16.mxu0 0
        %1739 = vmatmul.mubr.bf16.gmra.mrb[0].mxu0 %v1652
        %v1740 = vpop.f32.mrb[0].mxu0
        %v1741 = vadd.f32 0.0, %v1740
        %v1742 = vpop.f32.mrb[0].mxu0
        %v1743 = vpop.f32.mrb[0].mxu0
        %v1744 = vadd.f32 0.0, %v1743
        %v1745 = vpop.f32.mrb[0].mxu0
        %1746 = vmatprep.mubr.bf16.mxu0 0
        %1747 = vmatmul.mubr.bf16.gmra.mrb[0].mxu0 %v1654
        %v1748 = vpop.f32.mrb[0].mxu0
        %v1749 = vadd.f32 0.0, %v1748
        %v1750 = vpop.f32.mrb[0].mxu0
        %v1751 = vpop.f32.mrb[0].mxu0
        %v1752 = vadd.f32 0.0, %v1751
        %v1753 = vpop.f32.mrb[0].mxu0
        %1754 = vmatprep.mubr.bf16.mxu0 0
        %1755 = vmatmul.mubr.bf16.gmra.mrb[0].mxu0 %v1653
        %v1756 = vpop.f32.mrb[0].mxu0
        %v1757 = vadd.f32 0.0, %v1756
        %v1758 = vpop.f32.mrb[0].mxu0
        %v1759 = vpop.f32.mrb[0].mxu0
        %v1760 = vpop.f32.mrb[0].mxu0
        %1761 = vdwg.mxu0
        %v1762 = vadd.f32 %v1606, %v1741
        %v1763 = vadd.f32 %v1607, %v1744
        %v1764 = vadd.f32 %v1608, %v1749
        %v1765 = vadd.f32 %v1609, %v1752
        %v1766 = vadd.f32 %v1610, %v1757
        %1767 = vst [vmem:[#allocation2] sm:$0xff] %v1762
        %1768 = vst [vmem:[#allocation2 + $0x8] sm:$0xff] %v1763
        %1769 = vst [vmem:[#allocation2 + $0x10] sm:$0xff] %v1764
        %1770 = vst [vmem:[#allocation2 + $0x18] sm:$0xff] %v1765
        %1771 = vst [vmem:[#allocation2 + $0x20] sm:$0xff] %v1766
        %v1772 = vld [vmem:[#allocation2] sm:$0xff]
        %v1773 = vld [vmem:[#allocation2 + $0x8] sm:$0xff]
        %v1774 = vld [vmem:[#allocation2 + $0x10] sm:$0xff]
        %v1775 = vld [vmem:[#allocation2 + $0x18] sm:$0xff]
        %v1776 = vld [vmem:[#allocation2 + $0x20] sm:$0xff]
        %v1777 = vld [vmem:[%s238] sm:$0x1]
        %v1779 = vlaneseq
        %v1780 = vshrl.u32 %v1779, 7
        %v1781 = vsub.s32 0, %v1780
        %v1782 = vrot.slane %v1777, %v1781
        %v1784 = vadd.f32 %v1772, %v1782
        %v1785 = vadd.f32 %v1773, %v1782
        %v1786 = vadd.f32 %v1774, %v1782
        %v1787 = vadd.f32 %v1775, %v1782
        %v1788 = vadd.f32 %v1776, %v1782
        %v1789 = vmax.f32 %v1784, 0.0
        %v1790 = vmax.f32 %v1785, 0.0
        %v1791 = vmax.f32 %v1786, 0.0
        %v1792 = vmax.f32 %v1787, 0.0
        %v1793 = vmax.f32 %v1788, 0.0
        %v1794 = vpack.c.bf16 %v1790, %v1789
        %v1795 = vpack.c.bf16 %v1792, %v1791
        %v1796 = vpack.c.bf16 %v1793, %v1793
        %v1800 = vunpack.c.l.b16 %v1794
        %v1801 = vunpack.c.h.b16 %v1794
        %v1802 = vunpack.c.l.b16 %v1795
        %v1803 = vunpack.c.h.b16 %v1795
        %v1804 = vunpack.c.l.b16 %v1796
        %v1805 = vpack.c.b16 %v1800, %v1800
        %v1806 = vpack.c.b16 %v1801, %v1801
        %v1807 = vpack.c.b16 %v1802, %v1802
        %v1808 = vpack.c.b16 %v1803, %v1803
        %v1809 = vpack.c.b16 %v1804, %v1804
        %1815 = vst [vmem:[%s235] sm:$0xf] %v1805
        %1816 = vst [vmem:[%s235 + $0x4] sm:$0xf] %v1806
        %1817 = vst [vmem:[%s235 + $0x8] sm:$0xf] %v1807
        %1818 = vst [vmem:[%s235 + $0xc] sm:$0xf] %v1808
        %1819 = vst [vmem:[%s235 + $0x10] sm:$0xf] %v1809
        %s1820 = sand.u32 %s121, 1
        %s1821 = scalar_lea.sflag [#allocation5], %s1820
        %s1822 = sand.u32 %s121, 1
        %s1823 = smul.addr %s1822, 20
        %s1824 = scalar_lea.vmem [#allocation8], %s1823
        // Predicated region
        $region41: #{tpu_custom_call.1} parent=31 // pred_check
          %p1825 = pneg %p131
        $region42: #{tpu_custom_call.1} parent=31 // pred_check_branch
          %1827 = sbr.rel (%p1825) target = $region44
        $region43: #{tpu_custom_call.1} parent=31 // pred_region
          %s1829 = ssub.s32 320, 320
          %1830 = vsyncadd %s1821, %s1829
          %s1831 = smul.addr %s26, 5
          %s1832 = sadd.s32 %s25, %s1831
          %s1833 = smul.addr %s1832, 64
          %s1834 = scalar_lea.hbm %s3, %s1833
          %s1835 = sshll.u32 %s1824, 4
          %s1836 = int_to_ptr.vmem [resolvable:$true] %s1835
          %1841 = dma.vmem_to_hbm [thread:$0]  %s1836, 320, %s1834, %s1821, 64, 64, 4
        $region44: #{tpu_custom_call.1} parent=31 // pred_fallthru
          _
      $region32: #{tpu_custom_call.1} parent=5 // pred_fallthru
        _
      %p1842 = scmp.le.s32.totalorder 2, %s16
      // Predicated region
      $region45: #{tpu_custom_call.1} parent=5 // pred_check
        %p1843 = pneg %p1842
      $region46: #{tpu_custom_call.1} parent=5 // pred_check_branch
        %1845 = sbr.rel (%p1843) target = $region48
      $region47: #{tpu_custom_call.1} parent=5 // pred_region
        %s1846 = ssub.s32 %s16, 2
        // Predicated region
        $region49: #{tpu_custom_call.1} parent=47 // pred_check
          %p1847 = pneg %p137
        $region50: #{tpu_custom_call.1} parent=47 // pred_check_branch
          %1849 = sbr.rel (%p1847) target = $region52
        $region51: #{tpu_custom_call.1} parent=47 // pred_region
          %s1850 = sand.u32 %s122, 1
          %s1851 = scalar_lea.sflag [#allocation5], %s1850
          %s1852 = sand.u32 %s122, 1
          %s1853 = smul.addr %s1852, 20
          %s1854 = scalar_lea.vmem [#allocation8], %s1853
          %1855 = dma.done %s1851, 320
        $region52: #{tpu_custom_call.1} parent=47 // pred_fallthru
          _
      $region48: #{tpu_custom_call.1} parent=5 // pred_fallthru
        _
    $region6: #{tpu_custom_call.1} parent=1 // loop_footer
      %s20 = sadd.s32 1, %s16
    $region7: #{tpu_custom_call.1} parent=1 // loop_footer_branch
      %15 = sbr.rel target = $region3
    $region8: #{tpu_custom_call.1} parent=1 // loop_exit
      _
    %1856 = vsyncpa [#allocation4], 1
    %s1857 = scalar_lea.sflag [#allocation4], 1
    %1858 = vsyncpa %s1857, 1
    %1859 = vsyncpa [#allocation7], 1
    %1860 = vsyncpa [#allocation5], 1
    %s1861 = scalar_lea.sflag [#allocation5], 1
    %1862 = vsyncpa %s1861, 1

</llo_original>
